<compile_context>
chip_gen: v7x
topology: tpu7x:2x2x1
jax: 0.10.0
libtpu: 0.0.40
codegen_flags: <defaults>
</compile_context>

<pallas_src>
import functools

import jax
import jax.numpy as jnp
from jax.experimental import pallas as pl
from jax.experimental.pallas import tpu as pltpu


# ------------------------- hardware-generation config ------------------------

def _tpu_generation():
    try:
        kind = jax.devices()[0].device_kind.lower()
    except Exception:
        return 0
    for g in (7, 6, 5, 4, 3, 2):
        if (f"v{g}" in kind) or (f"{g}x" in kind) or (f"{g}e" in kind) or (f"{g}p" in kind):
            return g
    return 0


def _hw_config():
    gen = _tpu_generation()
    if gen >= 7:   # 64 MiB physical VMEM, bf16 VPU/EUP
        return dict(tile_cap=2048, vmem_limit=48 * 1024 * 1024, bf16_swish=True)
    if gen == 6:   # 128 MiB VMEM, bf16 VPU/EUP
        return dict(tile_cap=4096, vmem_limit=96 * 1024 * 1024, bf16_swish=True)
    if gen == 5:   # 128 MiB VMEM, no bf16 VPU/EUP
        return dict(tile_cap=4096, vmem_limit=96 * 1024 * 1024, bf16_swish=False)
    return dict(tile_cap=1024, vmem_limit=32 * 1024 * 1024, bf16_swish=False)


# ------------------------------ shared math helpers ---------------------------

def _head_act(head_f32, bf16_swish):
    """Swish on the (rows, 1280) head activation; bf16 path on v6e/v7x."""
    if bf16_swish:
        hb = head_f32.astype(jnp.bfloat16)
        return (hb * jax.nn.sigmoid(hb)).astype(jnp.float32)
    return head_f32 * jax.nn.sigmoid(head_f32)


# ----------------------------- fused Pallas kernel ---------------------------

def _fused_backbone_kernel(bf16_swish,
                           patch_ref, w_stem_ref, shift0_ref,
                           w_head_ref, shift1_ref,
                           o_ref, acc_ref):
    """One (batch, row-tile) grid step.

    stem matmul(+folded BN shift)+swish -> head matmul(+shift)+swish ->
    pooled-sum accumulation into an (8, feat) VMEM accumulator; the last
    row-tile of each batch collapses the 8 sublane partials and emits the
    (1, feat) pooled sum.
    """
    t = pl.program_id(1)

    @pl.when(t == 0)
    def _():
        acc_ref[...] = jnp.zeros_like(acc_ref)

    # stem: (tile_rows, Kp) bf16 @ (Kp, stem_ch) bf16 -> f32 acc on MXU.
    # BN scale is folded into w_stem at init; only the shift add remains.
    stem = jnp.dot(patch_ref[0], w_stem_ref[...],
                   preferred_element_type=jnp.float32)
    stem = stem + shift0_ref[...]
    stem = stem * jax.nn.sigmoid(stem)

    # head: 1x1 conv to feat_dim (== _fc.in_features == 1280 for b1).
    head = jnp.dot(stem.astype(jnp.bfloat16), w_head_ref[...],
                   preferred_element_type=jnp.float32)
    head = head + shift1_ref[...]
    head = _head_act(head, bf16_swish)

    # AdaptiveAvgPool2d(1) numerator: accumulate 8 sublane-partial rows (plain
    # per-vreg VPU adds); the cross-sublane collapse is deferred to finalize.
    tile_rows, feat = head.shape
    acc_ref[...] += jnp.sum(head.reshape(tile_rows // 8, 8, feat), axis=0)

    @pl.when(t == pl.num_programs(1) - 1)
    def _():
        o_ref[0] = jnp.sum(acc_ref[...], axis=0, keepdims=True)   # (1, feat)


def _pick_tile_rows(p, cap):
    """Row tile (multiple of 8) near `cap`; prefers exact divisors of p."""
    cap = max(8, (min(cap, p + 7) // 8) * 8)
    for cand in range(cap, max(7, cap // 2 - 1), -8):
        if p % cand == 0:
            return cand
    # No large exact divisor: pick the tile minimizing zero-row padding.
    n_tiles = max(1, -(-p // cap))
    return ((-(-p // n_tiles) + 7) // 8) * 8


def fused_backbone_forward(patches_bf16, params, tile_rows, num_tiles,
                           bf16_swish, vmem_limit):
    """Returns the per-batch pooled feature SUM, shape (B, feat_dim) f32."""
    b, p_pad, kp = patches_bf16.shape
    stem_ch = params['w_stem'].shape[1]
    feat_dim = params['w_head'].shape[1]
    assert p_pad == num_tiles * tile_rows and tile_rows % 8 == 0

    kernel = functools.partial(_fused_backbone_kernel, bf16_swish)
    const = lambda i, t: (0, 0)          # weights / shifts: constant blocks

    out = pl.pallas_call(
        kernel,
        out_shape=jax.ShapeDtypeStruct((b, 1, feat_dim), jnp.float32),
        grid_spec=pltpu.PrefetchScalarGridSpec(
            num_scalar_prefetch=0,
            grid=(b, num_tiles),
            in_specs=[
                pl.BlockSpec((1, tile_rows, kp), lambda i, t: (i, t, 0)),
                pl.BlockSpec((kp, stem_ch), const),
                pl.BlockSpec((1, stem_ch), const),
                pl.BlockSpec((stem_ch, feat_dim), const),
                pl.BlockSpec((1, feat_dim), const),
            ],
            out_specs=pl.BlockSpec((1, 1, feat_dim), lambda i, t: (i, 0, 0)),
            scratch_shapes=[pltpu.VMEM((8, feat_dim), jnp.float32)],
        ),
        compiler_params=pltpu.CompilerParams(
            dimension_semantics=("parallel", "arbitrary"),
            vmem_limit_bytes=vmem_limit,
        ),
    )(patches_bf16, params['w_stem'], params['shift0'],
      params['w_head'], params['shift1'])
    return out.reshape(b, feat_dim)


# ------------------------------- JAX glue ------------------------------------

def _im2col_3x3_s2(x_nhwc, k_pad):
    """3x3 / stride 2 / pad 1 patch extraction in the input dtype (bf16).

    Patch features ordered (kh, kw, c_in); the K-pad to `k_pad` is folded into
    the concat (no separate full-size jnp.pad copy).
    """
    b, h, w, c = x_nhwc.shape
    ho = (h + 2 - 3) // 2 + 1
    wo = (w + 2 - 3) // 2 + 1
    xp = jnp.pad(x_nhwc, ((0, 0), (1, 1), (1, 1), (0, 0)))
    cols = []
    for kh in range(3):
        for kw in range(3):
            cols.append(xp[:, kh:kh + 2 * ho:2, kw:kw + 2 * wo:2, :])
    if k_pad > 9 * c:
        cols.append(jnp.zeros((b, ho, wo, k_pad - 9 * c), x_nhwc.dtype))
    patches = jnp.concatenate(cols, axis=-1)               # (B, Ho, Wo, Kp)
    return patches.reshape(b, ho * wo, k_pad), (b, ho, wo)


def _pad_row_feature(params, bf16_swish):
    """Head feature produced by an all-zero (padded) patch row, shape (1, feat)."""
    stem = params['shift0']                                  # 0 @ W + shift0
    stem = stem * jax.nn.sigmoid(stem)
    head = jnp.dot(stem.astype(jnp.bfloat16), params['w_head'],
                   preferred_element_type=jnp.float32) + params['shift1']
    return _head_act(head, bf16_swish)


def init_params(key, in_ch=3, stem_ch=32, feat_dim=1280, num_classes=9, k_pad=32):
    """Deterministic synthetic parameters (EfficientNet-b1 stem/head + Linear(1280, 9)).

    Eval-mode BatchNorm is folded: the per-channel scale is folded into the
    (bf16) conv weights, only the additive shift is kept for the kernel.
    """
    ks = jax.random.split(key, 4)
    eps = 1e-3
    # _conv_stem: 3x3 stride-2 conv, HWIO flattened to (9*Cin, stem_ch), K padded to 32.
    w_stem = jax.random.normal(ks[0], (3, 3, in_ch, stem_ch), jnp.float32) * 0.1
    w_stem = w_stem.reshape(9 * in_ch, stem_ch)
    gamma0 = jnp.ones((stem_ch,), jnp.float32)
    beta0 = jnp.zeros((stem_ch,), jnp.float32)
    mean0 = jnp.zeros((stem_ch,), jnp.float32)
    var0 = jnp.ones((stem_ch,), jnp.float32)
    inv0 = gamma0 / jnp.sqrt(var0 + eps)
    w_stem = w_stem * inv0[None, :]                      # fold BN scale into W
    w_stem = jnp.pad(w_stem, ((0, k_pad - 9 * in_ch), (0, 0)))
    shift0 = (beta0 - mean0 * inv0).reshape(1, stem_ch)
    # _conv_head: 1x1 conv to feat_dim; identity BN -> scale 1 folded, shift 0.
    w_head = jax.random.normal(ks[1], (stem_ch, feat_dim), jnp.float32) * 0.05
    shift1 = jnp.zeros((1, feat_dim), jnp.float32)
    # image_predictors = nn.Linear(feat_dim, 9); stored (in, out) so y = x @ W + b.
    w_fc = jax.random.normal(ks[2], (feat_dim, num_classes), jnp.float32) * 0.02
    b_fc = jax.random.normal(ks[3], (1, num_classes), jnp.float32) * 0.02
    return dict(w_stem=w_stem.astype(jnp.bfloat16), shift0=shift0,
                w_head=w_head.astype(jnp.bfloat16), shift1=shift1,
                w_fc=w_fc, b_fc=b_fc)


@functools.partial(jax.jit, static_argnames=("tile_rows", "bf16_swish", "vmem_limit"))
def _forward_impl(params, imgs_nchw, *, tile_rows, bf16_swish, vmem_limit):
    x = jnp.transpose(imgs_nchw.astype(jnp.bfloat16), (0, 2, 3, 1))  # NCHW -> NHWC, bf16
    kp = params['w_stem'].shape[0]
    patches, (b, ho, wo) = _im2col_3x3_s2(x, kp)                     # (B, P, Kp) bf16
    p = ho * wo
    num_tiles = -(-p // tile_rows)
    p_pad = num_tiles * tile_rows
    if p_pad > p:
        patches = jnp.pad(patches, ((0, 0), (0, p_pad - p), (0, 0)))

    pooled_sum = fused_backbone_forward(patches, params, tile_rows, num_tiles,
                                        bf16_swish, vmem_limit)      # (B, feat)
    if p_pad > p:
        # Subtract the exact constant contribution of the zero-padded rows.
        pooled_sum = pooled_sum - (p_pad - p) * _pad_row_feature(params, bf16_swish)
    pooled = pooled_sum * (1.0 / p)                                  # AdaptiveAvgPool2d(1)
    # image_predictors = nn.Linear(feat_dim, 9): kept outside the kernel.
    return pooled @ params['w_fc'] + params['b_fc']                  # (B, 9)


def rsna_img_classifier_forward(params, imgs_nchw):
    cfg = _hw_config()
    _, _, h, w = imgs_nchw.shape
    ho = (h + 2 - 3) // 2 + 1
    wo = (w + 2 - 3) // 2 + 1
    tile_rows = _pick_tile_rows(ho * wo, cfg['tile_cap'])
    return _forward_impl(params, imgs_nchw, tile_rows=tile_rows,
                         bf16_swish=cfg['bf16_swish'],
                         vmem_limit=cfg['vmem_limit'])


def _reference(params, imgs_nchw):
    """Pure-JAX reference of the same graph (same folded weights / dtypes)."""
    cfg = _hw_config()
    x = jnp.transpose(imgs_nchw.astype(jnp.bfloat16), (0, 2, 3, 1))
    kp = params['w_stem'].shape[0]
    patches, (b, ho, wo) = _im2col_3x3_s2(x, kp)
    flat = patches.reshape(b * ho * wo, kp)
    stem = jnp.dot(flat, params['w_stem'],
                   preferred_element_type=jnp.float32) + params['shift0']
    stem = stem * jax.nn.sigmoid(stem)
    head = jnp.dot(stem.astype(jnp.bfloat16), params['w_head'],
                   preferred_element_type=jnp.float32) + params['shift1']
    head = _head_act(head, cfg['bf16_swish'])
    pooled = head.reshape(b, ho * wo, -1).mean(axis=1)
    return pooled @ params['w_fc'] + params['b_fc']


if __name__ == "__main__":
    key = jax.random.PRNGKey(0)
    pkey, xkey = jax.random.split(key)
    params = init_params(pkey)
    imgs = jax.random.normal(xkey, (2, 3, 16, 16), jnp.float32)   # NCHW, like the PyTorch module
    out = jax.block_until_ready(rsna_img_classifier_forward(params, imgs))
    ref = _reference(params, imgs)
    assert out.shape == (2, 9), out.shape
    assert jnp.allclose(out, ref, atol=2e-3, rtol=2e-3), "Pallas output mismatch vs reference"
    print("KERNEL_OK")
</pallas_src>

<mosaic_0001>
module attributes {stable_mosaic.version = 11 : i64} {
  func.func @_fused_backbone_kernel(%arg0: i32, %arg1: i32, %arg2: memref<1x64x32xbf16, #tpu.memory_space<vmem>>, %arg3: memref<32x32xbf16, #tpu.memory_space<vmem>>, %arg4: memref<1x32xf32, #tpu.memory_space<vmem>>, %arg5: memref<32x1280xbf16, #tpu.memory_space<vmem>>, %arg6: memref<1x1280xf32, #tpu.memory_space<vmem>>, %arg7: memref<1x1x1280xf32, #tpu.memory_space<vmem>>, %arg8: memref<8x1280xf32, #tpu.memory_space<vmem>>) attributes {dimension_semantics = [#tpu.dimension_semantics<parallel>, #tpu.dimension_semantics<arbitrary>], iteration_bounds = array<i64: 2, 1>, scalar_prefetch = 0 : i64, scratch_operands = 1 : i64, tpu.core_type = #tpu.core_type<tc>, window_params = [{transform_indices = @transform_0, window_bounds = array<i64: 1, 64, 32>}, {pipeline_mode = #tpu.pipeline_mode<synchronous>, transform_indices = @transform_1, window_bounds = array<i64: 32, 32>}, {pipeline_mode = #tpu.pipeline_mode<synchronous>, transform_indices = @transform_2, window_bounds = array<i64: 1, 32>}, {pipeline_mode = #tpu.pipeline_mode<synchronous>, transform_indices = @transform_3, window_bounds = array<i64: 32, 1280>}, {pipeline_mode = #tpu.pipeline_mode<synchronous>, transform_indices = @transform_4, window_bounds = array<i64: 1, 1280>}, {transform_indices = @transform_5, window_bounds = array<i64: 1, 1, 1280>}]} {
    %c0_i32 = arith.constant 0 : i32
    %0 = arith.cmpi eq, %arg1, %c0_i32 : i32
    %1 = arith.extui %0 : i1 to i32
    %c0_i32_0 = arith.constant 0 : i32
    %2 = arith.cmpi ne, %1, %c0_i32_0 : i32
    scf.if %2 {
      %cst_21 = arith.constant 0.000000e+00 : f32
      %36 = vector.broadcast %cst_21 : f32 to vector<8x1280xf32>
      %c0_22 = arith.constant 0 : index
      %c0_23 = arith.constant 0 : index
      %37 = vector.load %arg8[%c0_22, %c0_23] : memref<8x1280xf32, #tpu.memory_space<vmem>>, vector<8x1280xf32>
      tpu.vector_store %arg8[%c0_22, %c0_23], %36 {strides = array<i32>} : memref<8x1280xf32, #tpu.memory_space<vmem>>, vector<8x1280xf32>,
    } else {
    }
    %c0 = arith.constant 0 : index
    %c0_1 = arith.constant 0 : index
    %c0_2 = arith.constant 0 : index
    %3 = vector.load %arg2[%c0, %c0_1, %c0_2] : memref<1x64x32xbf16, #tpu.memory_space<vmem>>, vector<1x64x32xbf16>
    %4 = vector.shape_cast %3 : vector<1x64x32xbf16> to vector<64x32xbf16>
    %c0_3 = arith.constant 0 : index
    %c0_4 = arith.constant 0 : index
    %5 = vector.load %arg3[%c0_3, %c0_4] : memref<32x32xbf16, #tpu.memory_space<vmem>>, vector<32x32xbf16>
    %cst = arith.constant dense<0.000000e+00> : vector<64x32xf32>
    %6 = tpu.matmul %4, %5, %cst {dimension_numbers = #tpu.dot_dimension_numbers<[1], [0], [0], [1], [0, 0, 1, 1], [], []>} : vector<64x32xbf16>, vector<32x32xbf16>, vector<64x32xf32> -> vector<64x32xf32>
    %c0_5 = arith.constant 0 : index
    %c0_6 = arith.constant 0 : index
    %7 = vector.load %arg4[%c0_5, %c0_6] : memref<1x32xf32, #tpu.memory_space<vmem>>, vector<1x32xf32>
    %8 = vector.broadcast %7 : vector<1x32xf32> to vector<64x32xf32>
    %9 = arith.addf %6, %8 : vector<64x32xf32>
    %10 = arith.negf %9 : vector<64x32xf32>
    %11 = math.exp %10 : vector<64x32xf32>
    %cst_7 = arith.constant 1.000000e+00 : f32
    %12 = vector.broadcast %cst_7 : f32 to vector<64x32xf32>
    %13 = arith.addf %12, %11 : vector<64x32xf32>
    %14 = arith.divf %12, %13 : vector<64x32xf32>
    %15 = arith.mulf %9, %14 : vector<64x32xf32>
    %16 = arith.truncf %15 : vector<64x32xf32> to vector<64x32xbf16>
    %c0_8 = arith.constant 0 : index
    %c0_9 = arith.constant 0 : index
    %17 = vector.load %arg5[%c0_8, %c0_9] : memref<32x1280xbf16, #tpu.memory_space<vmem>>, vector<32x1280xbf16>
    %cst_10 = arith.constant dense<0.000000e+00> : vector<64x1280xf32>
    %18 = tpu.matmul %16, %17, %cst_10 {dimension_numbers = #tpu.dot_dimension_numbers<[1], [0], [0], [1], [0, 0, 1, 1], [], []>} : vector<64x32xbf16>, vector<32x1280xbf16>, vector<64x1280xf32> -> vector<64x1280xf32>
    %c0_11 = arith.constant 0 : index
    %c0_12 = arith.constant 0 : index
    %19 = vector.load %arg6[%c0_11, %c0_12] : memref<1x1280xf32, #tpu.memory_space<vmem>>, vector<1x1280xf32>
    %20 = vector.broadcast %19 : vector<1x1280xf32> to vector<64x1280xf32>
    %21 = arith.addf %18, %20 : vector<64x1280xf32>
    %22 = arith.negf %21 : vector<64x1280xf32>
    %23 = math.exp %22 : vector<64x1280xf32>
    %cst_13 = arith.constant 1.000000e+00 : f32
    %24 = vector.broadcast %cst_13 : f32 to vector<64x1280xf32>
    %25 = arith.addf %24, %23 : vector<64x1280xf32>
    %26 = arith.divf %24, %25 : vector<64x1280xf32>
    %27 = arith.mulf %21, %26 : vector<64x1280xf32>
    %c0_14 = arith.constant 0 : index
    %c0_15 = arith.constant 0 : index
    %28 = vector.load %arg8[%c0_14, %c0_15] : memref<8x1280xf32, #tpu.memory_space<vmem>>, vector<8x1280xf32>
    %29 = vector.shape_cast %27 : vector<64x1280xf32> to vector<8x8x1280xf32>
    %cst_16 = arith.constant dense<0.000000e+00> : vector<8x1280xf32>
    %30 = vector.multi_reduction <add>, %29, %cst_16 [0] : vector<8x8x1280xf32> to vector<8x1280xf32>
    %31 = arith.addf %28, %30 : vector<8x1280xf32>
    %c0_17 = arith.constant 0 : index
    %c0_18 = arith.constant 0 : index
    %32 = vector.load %arg8[%c0_17, %c0_18] : memref<8x1280xf32, #tpu.memory_space<vmem>>, vector<8x1280xf32>
    tpu.vector_store %arg8[%c0_17, %c0_18], %31 {strides = array<i32>} : memref<8x1280xf32, #tpu.memory_space<vmem>>, vector<8x1280xf32>,
    %c0_i32_19 = arith.constant 0 : i32
    %33 = arith.cmpi eq, %arg1, %c0_i32_19 : i32
    %34 = arith.extui %33 : i1 to i32
    %c0_i32_20 = arith.constant 0 : i32
    %35 = arith.cmpi ne, %34, %c0_i32_20 : i32
    scf.if %35 {
      %c0_21 = arith.constant 0 : index
      %c0_22 = arith.constant 0 : index
      %36 = vector.load %arg8[%c0_21, %c0_22] : memref<8x1280xf32, #tpu.memory_space<vmem>>, vector<8x1280xf32>
      %cst_23 = arith.constant dense<0.000000e+00> : vector<1280xf32>
      %37 = vector.multi_reduction <add>, %36, %cst_23 [0] : vector<8x1280xf32> to vector<1280xf32>
      %38 = vector.shape_cast %37 : vector<1280xf32> to vector<1x1280xf32>
      %c0_24 = arith.constant 0 : index
      %c0_25 = arith.constant 0 : index
      %c0_26 = arith.constant 0 : index
      %39 = vector.load %arg7[%c0_24, %c0_25, %c0_26] : memref<1x1x1280xf32, #tpu.memory_space<vmem>>, vector<1x1x1280xf32>
      %40 = vector.shape_cast %39 : vector<1x1x1280xf32> to vector<1x1280xf32>
      %41 = vector.shape_cast %38 : vector<1x1280xf32> to vector<1x1x1280xf32>
      tpu.vector_store %arg7[%c0_24, %c0_25, %c0_26], %41 {strides = array<i32>} : memref<1x1x1280xf32, #tpu.memory_space<vmem>>, vector<1x1x1280xf32>,
    } else {
    }
    return
  }
  func.func @transform_0(%arg0: i32, %arg1: i32) -> (i32, i32, i32) {
    %c0_i32 = arith.constant 0 : i32
    %c0_i32_0 = arith.constant 0 : i32
    return %arg0, %arg1, %c0_i32 : i32, i32, i32
  }
  func.func @transform_1(%arg0: i32, %arg1: i32) -> (i32, i32) {
    %c0_i32 = arith.constant 0 : i32
    %c0_i32_0 = arith.constant 0 : i32
    %c0_i32_1 = arith.constant 0 : i32
    return %c0_i32, %c0_i32_0 : i32, i32
  }
  func.func @transform_2(%arg0: i32, %arg1: i32) -> (i32, i32) {
    %c0_i32 = arith.constant 0 : i32
    %c0_i32_0 = arith.constant 0 : i32
    %c0_i32_1 = arith.constant 0 : i32
    return %c0_i32, %c0_i32_0 : i32, i32
  }
  func.func @transform_3(%arg0: i32, %arg1: i32) -> (i32, i32) {
    %c0_i32 = arith.constant 0 : i32
    %c0_i32_0 = arith.constant 0 : i32
    %c0_i32_1 = arith.constant 0 : i32
    return %c0_i32, %c0_i32_0 : i32, i32
  }
  func.func @transform_4(%arg0: i32, %arg1: i32) -> (i32, i32) {
    %c0_i32 = arith.constant 0 : i32
    %c0_i32_0 = arith.constant 0 : i32
    %c0_i32_1 = arith.constant 0 : i32
    return %c0_i32, %c0_i32_0 : i32, i32
  }
  func.func @transform_5(%arg0: i32, %arg1: i32) -> (i32, i32, i32) {
    %c0_i32 = arith.constant 0 : i32
    %c0_i32_0 = arith.constant 0 : i32
    %c0_i32_1 = arith.constant 0 : i32
    return %arg0, %c0_i32, %c0_i32_0 : i32, i32, i32
  }
}

</mosaic_0001>

<llo_original>
// kernel: _forward_impl.1
$region0: #{_forward_impl.1}
  #allocation0 [shape = 'u32[]', space=smem, size = 0x4, offset = 0x4, fixed_abs, tag = 'smem constant byte address 0x4 - core index']
  #allocation1 [shape = 'u32[144,128]{1,0:T(1,128)}', space=vmem, size = 0x12000, scoped, tag = 'internal scratch']
  #allocation2 [shape = 'f32[8,1280]{1,0:T(8,128)}', space=vmem, size = 0xa000, scoped, tag = 'scratch operand']
  %s0 = inlined_call_operand.vmem [shape: bf16[2,64,32], index: 0, kind: input, shape index: {}]
  %s1 = inlined_call_operand.vmem [shape: bf16[32,32], index: 1, kind: input, shape index: {}]
  %s2 = inlined_call_operand.vmem [shape: f32[1,32], index: 2, kind: input, shape index: {}]
  %s3 = inlined_call_operand.vmem [shape: bf16[32,1280], index: 3, kind: input, shape index: {}]
  %s4 = inlined_call_operand.vmem [shape: f32[1,1280], index: 4, kind: input, shape index: {}]
  %s5 = inlined_call_operand.vmem [shape: f32[2,1,1280], index: 5, kind: output, shape index: {}]
  %s6 = sld [smem:[#allocation0]]
  $region61: #{_forward_impl.1} parent=0
    _
  %s8 = ssub.s32 1, %s6
  %s9 = scalar_select 0, %s8, %s6
  loop: start=0, step=1, limit=4
  $region2: #{_forward_impl.1} parent=0 // loop_pre_header
    _
  $region3: #{_forward_impl.1} parent=0 // loop_header
    %s11 = sphi 0, %s15
    %p12 = scmp.ge.s32.totalorder %s11, 4
    %s18 = sphi 0, %s30
    %s19 = sphi 0, %s26
    %s20 = sphi 0, %s18
    %s21 = sphi 0, %s19
    %s22 = sphi 0, %s20
    %s23 = sphi 0, %s21
    %s35 = sphi 0, %s37
    %s38 = sphi 0, %s35
    %s39 = sphi 0, %s38
    %s55 = sphi 0, %s39
    %s59 = sphi 0, %s59
    %s61 = sphi 0, %s59
    %s62 = sphi 0, %s61
    %s76 = sphi 0, %s62
    %s80 = sphi 0, %s80
    %s82 = sphi 0, %s80
    %s83 = sphi 0, %s82
    %s97 = sphi 0, %s83
    %s101 = sphi 0, %s101
    %s103 = sphi 0, %s101
    %s104 = sphi 0, %s103
    %s118 = sphi 0, %s104
    %s122 = sphi 0, %s122
    %s124 = sphi 0, %s122
    %s125 = sphi 0, %s124
    %s139 = sphi 0, %s125
    %s145 = sphi 0, %s147
    %s148 = sphi 0, %s145
    %s149 = sphi 0, %s148
    %s165 = sphi 0, %s149
  $region4: #{_forward_impl.1} parent=0 // loop_header_branch
    %14 = sbr.rel (%p12) target = $region8
  $region5: #{_forward_impl.1} parent=0 // loop_body
    %s16 = ssub.s32 %s11, 1
    %s17 = ssub.s32 %s11, 2
    %s24 = sadd.s32 1, %s19
    %p25 = scmp.ge.s32.totalorder %s24, 1
    %s26 = scalar_select %p25, 0, %s24
    %s27 = sadd.s32 1, %s18
    %s28 = scalar_select %p25, %s27, %s18
    %p29 = scmp.ge.s32.totalorder %s28, 2
    %s30 = scalar_select %p29, 0, %s28
    %s31 = ssub.s32 %s18, %s30
    %s32 = ssub.s32 %s19, %s26
    %s33 = sor.u32 %s31, %s32
    %p34 = scmp.eq.s32.totalorder %s33, 0
    %s36 = sadd.s32 %s35, 1
    %s37 = scalar_select %p34, %s35, %s36
    %p40 = pneg %p34
    %p41 = scmp.eq.s32.totalorder %s11, 1
    %p42 = por %p40, %p41
    %p43 = scmp.ne.s32.totalorder %s35, %s38
    %p44 = scmp.eq.s32.totalorder %s11, 0
    %p45 = por %p43, %p44
    %p46 = scmp.ne.s32.totalorder %s35, %s38
    %p47 = scmp.eq.s32.totalorder %s16, 1
    %p48 = por %p46, %p47
    %p49 = scmp.ne.s32.totalorder %s38, %s39
    %p50 = scmp.eq.s32.totalorder %s16, 0
    %p51 = por %p49, %p50
    %p52 = scmp.ne.s32.totalorder %s38, %s39
    %p53 = scmp.eq.s32.totalorder %s17, 1
    %p54 = por %p52, %p53
    %p56 = scmp.ne.s32.totalorder %s39, %s55
    %p57 = scmp.eq.s32.totalorder %s17, 0
    %p58 = por %p56, %p57
    %s60 = sadd.s32 %s59, 1
    %p63 = scmp.eq.s32.totalorder %s11, 1
    %p64 = scmp.ne.s32.totalorder %s59, %s61
    %p65 = scmp.eq.s32.totalorder %s11, 0
    %p66 = por %p64, %p65
    %p67 = scmp.ne.s32.totalorder %s59, %s61
    %p68 = scmp.eq.s32.totalorder %s16, 1
    %p69 = por %p67, %p68
    %p70 = scmp.ne.s32.totalorder %s61, %s62
    %p71 = scmp.eq.s32.totalorder %s16, 0
    %p72 = por %p70, %p71
    %p73 = scmp.ne.s32.totalorder %s61, %s62
    %p74 = scmp.eq.s32.totalorder %s17, 1
    %p75 = por %p73, %p74
    %p77 = scmp.ne.s32.totalorder %s62, %s76
    %p78 = scmp.eq.s32.totalorder %s17, 0
    %p79 = por %p77, %p78
    %s81 = sadd.s32 %s80, 1
    %p84 = scmp.eq.s32.totalorder %s11, 1
    %p85 = scmp.ne.s32.totalorder %s80, %s82
    %p86 = scmp.eq.s32.totalorder %s11, 0
    %p87 = por %p85, %p86
    %p88 = scmp.ne.s32.totalorder %s80, %s82
    %p89 = scmp.eq.s32.totalorder %s16, 1
    %p90 = por %p88, %p89
    %p91 = scmp.ne.s32.totalorder %s82, %s83
    %p92 = scmp.eq.s32.totalorder %s16, 0
    %p93 = por %p91, %p92
    %p94 = scmp.ne.s32.totalorder %s82, %s83
    %p95 = scmp.eq.s32.totalorder %s17, 1
    %p96 = por %p94, %p95
    %p98 = scmp.ne.s32.totalorder %s83, %s97
    %p99 = scmp.eq.s32.totalorder %s17, 0
    %p100 = por %p98, %p99
    %s102 = sadd.s32 %s101, 1
    %p105 = scmp.eq.s32.totalorder %s11, 1
    %p106 = scmp.ne.s32.totalorder %s101, %s103
    %p107 = scmp.eq.s32.totalorder %s11, 0
    %p108 = por %p106, %p107
    %p109 = scmp.ne.s32.totalorder %s101, %s103
    %p110 = scmp.eq.s32.totalorder %s16, 1
    %p111 = por %p109, %p110
    %p112 = scmp.ne.s32.totalorder %s103, %s104
    %p113 = scmp.eq.s32.totalorder %s16, 0
    %p114 = por %p112, %p113
    %p115 = scmp.ne.s32.totalorder %s103, %s104
    %p116 = scmp.eq.s32.totalorder %s17, 1
    %p117 = por %p115, %p116
    %p119 = scmp.ne.s32.totalorder %s104, %s118
    %p120 = scmp.eq.s32.totalorder %s17, 0
    %p121 = por %p119, %p120
    %s123 = sadd.s32 %s122, 1
    %p126 = scmp.eq.s32.totalorder %s11, 1
    %p127 = scmp.ne.s32.totalorder %s122, %s124
    %p128 = scmp.eq.s32.totalorder %s11, 0
    %p129 = por %p127, %p128
    %p130 = scmp.ne.s32.totalorder %s122, %s124
    %p131 = scmp.eq.s32.totalorder %s16, 1
    %p132 = por %p130, %p131
    %p133 = scmp.ne.s32.totalorder %s124, %s125
    %p134 = scmp.eq.s32.totalorder %s16, 0
    %p135 = por %p133, %p134
    %p136 = scmp.ne.s32.totalorder %s124, %s125
    %p137 = scmp.eq.s32.totalorder %s17, 1
    %p138 = por %p136, %p137
    %p140 = scmp.ne.s32.totalorder %s125, %s139
    %p141 = scmp.eq.s32.totalorder %s17, 0
    %p142 = por %p140, %p141
    %s143 = ssub.s32 %s18, %s30
    %p144 = scmp.eq.s32.totalorder %s143, 0
    %s146 = sadd.s32 %s145, 1
    %s147 = scalar_select %p144, %s145, %s146
    %p150 = pneg %p144
    %p151 = scmp.eq.s32.totalorder %s11, 1
    %p152 = por %p150, %p151
    %p153 = scmp.ne.s32.totalorder %s145, %s148
    %p154 = scmp.eq.s32.totalorder %s11, 0
    %p155 = por %p153, %p154
    %p156 = scmp.ne.s32.totalorder %s145, %s148
    %p157 = scmp.eq.s32.totalorder %s16, 1
    %p158 = por %p156, %p157
    %p159 = scmp.ne.s32.totalorder %s148, %s149
    %p160 = scmp.eq.s32.totalorder %s16, 0
    %p161 = por %p159, %p160
    %p162 = scmp.ne.s32.totalorder %s148, %s149
    %p163 = scmp.eq.s32.totalorder %s17, 1
    %p164 = por %p162, %p163
    %p166 = scmp.ne.s32.totalorder %s149, %s165
    %p167 = scmp.eq.s32.totalorder %s17, 0
    %p168 = por %p166, %p167
    %p169 = scmp.le.s32.totalorder 1, %s11
    %p170 = scmp.lt.s32.totalorder %s11, 3
    %p171 = pnand %p169, %p170
    %p172 = pneg %p171
    // Predicated region
    $region9: #{_forward_impl.1} parent=5 // pred_check
      _
    $region10: #{_forward_impl.1} parent=5 // pred_check_branch
      %174 = sbr.rel (%p171) target = $region12
    $region11: #{_forward_impl.1} parent=5 // pred_region
      %s175 = ssub.s32 %s11, 1
      // Predicated region
      $region13: #{_forward_impl.1} parent=11 // pred_check
        %p176 = pneg %p72
      $region14: #{_forward_impl.1} parent=11 // pred_check_branch
        %178 = sbr.rel (%p176) target = $region16
      $region15: #{_forward_impl.1} parent=11 // pred_region
        _
      $region16: #{_forward_impl.1} parent=11 // pred_fallthru
        _
      // Predicated region
      $region17: #{_forward_impl.1} parent=11 // pred_check
        %p179 = pneg %p93
      $region18: #{_forward_impl.1} parent=11 // pred_check_branch
        %181 = sbr.rel (%p179) target = $region20
      $region19: #{_forward_impl.1} parent=11 // pred_region
        _
      $region20: #{_forward_impl.1} parent=11 // pred_fallthru
        _
      // Predicated region
      $region21: #{_forward_impl.1} parent=11 // pred_check
        %p182 = pneg %p114
      $region22: #{_forward_impl.1} parent=11 // pred_check_branch
        %184 = sbr.rel (%p182) target = $region24
      $region23: #{_forward_impl.1} parent=11 // pred_region
        _
      $region24: #{_forward_impl.1} parent=11 // pred_fallthru
        _
      // Predicated region
      $region25: #{_forward_impl.1} parent=11 // pred_check
        %p185 = pneg %p135
      $region26: #{_forward_impl.1} parent=11 // pred_check_branch
        %187 = sbr.rel (%p185) target = $region28
      $region27: #{_forward_impl.1} parent=11 // pred_region
        _
      $region28: #{_forward_impl.1} parent=11 // pred_fallthru
        _
    $region12: #{_forward_impl.1} parent=5 // pred_fallthru
      _
    %p188 = scmp.lt.s32.totalorder %s11, 2
    // Predicated region
    $region29: #{_forward_impl.1} parent=5 // pred_check
      %p189 = pneg %p188
    $region30: #{_forward_impl.1} parent=5 // pred_check_branch
      %191 = sbr.rel (%p189) target = $region32
    $region31: #{_forward_impl.1} parent=5 // pred_region
      // Predicated region
      $region33: #{_forward_impl.1} parent=31 // pred_check
        %p192 = pneg %p45
      $region34: #{_forward_impl.1} parent=31 // pred_check_branch
        %194 = sbr.rel (%p192) target = $region36
      $region35: #{_forward_impl.1} parent=31 // pred_region
        %s195 = smul.u32 8, %s19
        %p196 = scmp.lt.s32.totalorder %s18, 1
        %s197 = scalar_select %p196, %s18, 1
        %p198 = scmp.lt.s32.totalorder %s195, 7
        %s199 = scalar_select %p198, %s195, 7
        %s200 = smul.addr %s197, 8
        %s201 = sadd.s32 %s199, %s200
        %s202 = smul.addr %s201, 4
        %s203 = scalar_lea.vmem %s0, %s202
        %s204 = smul.u32 8, %s19
      $region36: #{_forward_impl.1} parent=31 // pred_fallthru
        _
    $region32: #{_forward_impl.1} parent=5 // pred_fallthru
      _
    %p205 = scmp.le.s32.totalorder 1, %s11
    %p206 = scmp.lt.s32.totalorder %s11, 3
    %p207 = pnand %p205, %p206
    %p208 = pneg %p207
    // Predicated region
    $region37: #{_forward_impl.1} parent=5 // pred_check
      _
    $region38: #{_forward_impl.1} parent=5 // pred_check_branch
      %210 = sbr.rel (%p207) target = $region40
    $region39: #{_forward_impl.1} parent=5 // pred_region
      %s211 = ssub.s32 %s11, 1
      %s212 = smul.u32 8, %s21
      %p213 = scmp.lt.s32.totalorder %s20, 1
      %s214 = scalar_select %p213, %s20, 1
      %p215 = scmp.lt.s32.totalorder %s212, 7
      %s216 = scalar_select %p215, %s212, 7
      %s217 = smul.addr %s214, 8
      %s218 = sadd.s32 %s216, %s217
      %s219 = smul.addr %s218, 4
      %s220 = scalar_lea.vmem %s0, %s219
      %p221 = pneg %p51
      %p222 = pneg %p48
      %p223 = pneg %p72
      %p224 = pneg %p69
      %p225 = pneg %p93
      %p226 = pneg %p90
      %p227 = pneg %p114
      %p228 = pneg %p111
      %p229 = pneg %p135
      %p230 = pneg %p132
      %p231 = pneg %p161
      %p232 = pneg %p158
      %p233 = scmp.lt.s32.totalorder %s20, 1
      %s234 = scalar_select %p233, %s20, 1
      %s235 = smul.addr %s234, 10
      %s236 = scalar_lea.vmem %s5, %s235
      %s237 = smul.u32 8, %s21
      %p238 = scmp.lt.s32.totalorder %s20, 1
      %s239 = scalar_select %p238, %s20, 1
      %p240 = scmp.lt.s32.totalorder %s237, 7
      %s241 = scalar_select %p240, %s237, 7
      %s242 = smul.addr %s239, 8
      %s243 = sadd.s32 %s241, %s242
      %s244 = smul.addr %s243, 4
      %s245 = scalar_lea.vmem %s0, %s244
      %s246 = smul.u32 8, %s21
      %p247 = scmp.lt.s32.totalorder %s20, 1
      %s248 = scalar_select %p247, %s20, 1
      %s249 = smul.addr %s248, 10
      %s250 = scalar_lea.vmem %s5, %s249
      %p252 = scmp.eq.s32.totalorder %s21, 0
      // Predicated region
      $region41: #{_forward_impl.1} parent=39 // pred_check
        %p253 = pneg %p252
      $region42: #{_forward_impl.1} parent=39 // pred_check_branch
        %255 = sbr.rel (%p253) target = $region44
      $region43: #{_forward_impl.1} parent=39 // pred_region
        %256 = vst [vmem:[#allocation2] sm:$0xff] 0.0
        %257 = vst [vmem:[#allocation2 + $0x8] sm:$0xff] 0.0
        %258 = vst [vmem:[#allocation2 + $0x10] sm:$0xff] 0.0
        %259 = vst [vmem:[#allocation2 + $0x18] sm:$0xff] 0.0
        %260 = vst [vmem:[#allocation2 + $0x20] sm:$0xff] 0.0
        %261 = vst [vmem:[#allocation2 + $0x28] sm:$0xff] 0.0
        %262 = vst [vmem:[#allocation2 + $0x30] sm:$0xff] 0.0
        %263 = vst [vmem:[#allocation2 + $0x38] sm:$0xff] 0.0
        %264 = vst [vmem:[#allocation2 + $0x40] sm:$0xff] 0.0
        %265 = vst [vmem:[#allocation2 + $0x48] sm:$0xff] 0.0
      $region44: #{_forward_impl.1} parent=39 // pred_fallthru
        _
      %v266 = vld [vmem:[%s245] sm:$0xf]
      %v267 = vld [vmem:[%s245 + $0x4] sm:$0xf]
      %v268 = vld [vmem:[%s245 + $0x8] sm:$0xf]
      %v269 = vld [vmem:[%s245 + $0xc] sm:$0xf]
      %v270 = vld [vmem:[%s245 + $0x10] sm:$0xf]
      %v271 = vld [vmem:[%s245 + $0x14] sm:$0xf]
      %v272 = vld [vmem:[%s245 + $0x18] sm:$0xf]
      %v273 = vld [vmem:[%s245 + $0x1c] sm:$0xf]
      %v274 = vld [vmem:[%s1] sm:$0xf]
      %v275 = vld [vmem:[%s1 + $0x4] sm:$0xf]
      %v276 = vld [vmem:[%s1 + $0x8] sm:$0xf]
      %v277 = vld [vmem:[%s1 + $0xc] sm:$0xf]
      %v278 = vld [vmem:[%s2] sm:$0x1]
      %v280 = vlaneseq
      %v281 = vshrl.u32 %v280, 7
      %v282 = vsub.s32 0, %v281
      %v283 = vrot.slane %v278, %v282
      %v293 = vunpack.c.l.b16 %v266
      %v294 = vunpack.c.l.b16 %v267
      %v295 = vunpack.c.l.b16 %v268
      %v296 = vunpack.c.l.b16 %v269
      %v297 = vunpack.c.l.b16 %v270
      %v298 = vunpack.c.l.b16 %v271
      %v299 = vunpack.c.l.b16 %v272
      %v300 = vunpack.c.l.b16 %v273
      %v301 = vpack.c.b16 %v294, %v293
      %v302 = vpack.c.b16 %v296, %v295
      %v303 = vpack.c.b16 %v298, %v297
      %v304 = vpack.c.b16 %v300, %v299
      %v309 = vunpack.c.l.b16 %v274
      %v310 = vunpack.c.l.b16 %v275
      %v311 = vunpack.c.l.b16 %v276
      %v312 = vunpack.c.l.b16 %v277
      %v313 = vpack.c.b16 %v310, %v309
      %v314 = vpack.c.b16 %v312, %v311
      %vm317 = vcmask 261120
      %v319 = vsel %vm317, %v301, 0
      %v322 = vsel %vm317, %v302, 0
      %v325 = vsel %vm317, %v303, 0
      %v328 = vsel %vm317, %v304, 0
      %330 = vmatprep.subr.bf16.mxu0 0
      %331 = vmatpush1.bf16.msra.mxu0 %v313
      %332 = vmatprep.subr.bf16.mxu0 0
      %333 = vmatpush1.bf16.msra.mxu0 %v314
      %334 = vmatprep.subr.bf16.mxu0 0
      %335 = vmatpush1.bf16.msra.mxu0 0
      %336 = vmatprep.subr.bf16.mxu0 0
      %337 = vmatpush1.bf16.msra.mxu0 0
      %338 = vmatprep.subr.bf16.mxu0 0
      %339 = vmatpush1.bf16.msra.mxu0 0
      %340 = vmatprep.subr.bf16.mxu0 0
      %341 = vmatpush1.bf16.msra.mxu0 0
      %342 = vmatprep.subr.bf16.mxu0 0
      %343 = vmatpush1.bf16.msra.mxu0 0
      %344 = vmatprep.subr.bf16.mxu0 0
      %345 = vmatpush1.bf16.msra.mxu0 0
      %346 = vmatprep.subr.bf16.mxu0 0
      %347 = vmatpush1.bf16.msra.mxu0 0
      %348 = vmatprep.subr.bf16.mxu0 0
      %349 = vmatpush1.bf16.msra.mxu0 0
      %350 = vmatprep.subr.bf16.mxu0 0
      %351 = vmatpush1.bf16.msra.mxu0 0
      %352 = vmatprep.subr.bf16.mxu0 0
      %353 = vmatpush1.bf16.msra.mxu0 0
      %354 = vmatprep.subr.bf16.mxu0 0
      %355 = vmatpush1.bf16.msra.mxu0 0
      %356 = vmatprep.subr.bf16.mxu0 0
      %357 = vmatpush1.bf16.msra.mxu0 0
      %358 = vmatprep.subr.bf16.mxu0 0
      %359 = vmatpush1.bf16.msra.mxu0 0
      %360 = vmatprep.subr.bf16.mxu0 0
      %361 = vmatpush1.bf16.msra.mxu0 0
      %362 = vmatprep.mubr.bf16.mxu0 0
      %363 = vmatmul.mubr.bf16.gmra.mrb[0].mxu0 %v319
      %v364 = vpop.f32.mrb[0].mxu0
      %v365 = vadd.f32 %v283, %v364
      %v366 = vpop.f32.mrb[0].mxu0
      %v367 = vpop.f32.mrb[0].mxu0
      %v368 = vadd.f32 %v283, %v367
      %v369 = vpop.f32.mrb[0].mxu0
      %370 = vmatprep.mubr.bf16.mxu0 0
      %371 = vmatmul.mubr.bf16.gmra.mrb[0].mxu0 %v322
      %v372 = vpop.f32.mrb[0].mxu0
      %v373 = vadd.f32 %v283, %v372
      %v374 = vpop.f32.mrb[0].mxu0
      %v375 = vpop.f32.mrb[0].mxu0
      %v376 = vadd.f32 %v283, %v375
      %v377 = vpop.f32.mrb[0].mxu0
      %378 = vmatprep.mubr.bf16.mxu0 0
      %379 = vmatmul.mubr.bf16.gmra.mrb[0].mxu0 %v325
      %v380 = vpop.f32.mrb[0].mxu0
      %v381 = vadd.f32 %v283, %v380
      %v382 = vpop.f32.mrb[0].mxu0
      %v383 = vpop.f32.mrb[0].mxu0
      %v384 = vadd.f32 %v283, %v383
      %v385 = vpop.f32.mrb[0].mxu0
      %386 = vmatprep.mubr.bf16.mxu0 0
      %387 = vmatmul.mubr.bf16.gmra.mrb[0].mxu0 %v328
      %v388 = vpop.f32.mrb[0].mxu0
      %v389 = vadd.f32 %v283, %v388
      %v390 = vpop.f32.mrb[0].mxu0
      %v391 = vpop.f32.mrb[0].mxu0
      %v392 = vadd.f32 %v283, %v391
      %v393 = vpop.f32.mrb[0].mxu0
      %394 = vdwg.mxu0
      %v395 = vxor.u32 %v365, 2147483648
      %v396 = vxor.u32 %v368, 2147483648
      %v397 = vxor.u32 %v373, 2147483648
      %v398 = vxor.u32 %v376, 2147483648
      %v399 = vxor.u32 %v381, 2147483648
      %v400 = vxor.u32 %v384, 2147483648
      %v401 = vxor.u32 %v389, 2147483648
      %v402 = vxor.u32 %v392, 2147483648
      %v403 = vmul.f32 %v395, 1.442695
      %v404 = vpow.pop %v403
      %v405 = vmul.f32 %v396, 1.442695
      %v406 = vpow.pop %v405
      %v407 = vmul.f32 %v397, 1.442695
      %v408 = vpow.pop %v407
      %v409 = vmul.f32 %v398, 1.442695
      %v410 = vpow.pop %v409
      %v411 = vmul.f32 %v399, 1.442695
      %v412 = vpow.pop %v411
      %v413 = vmul.f32 %v400, 1.442695
      %v414 = vpow.pop %v413
      %v415 = vmul.f32 %v401, 1.442695
      %v416 = vpow.pop %v415
      %v417 = vmul.f32 %v402, 1.442695
      %v418 = vpow.pop %v417
      %v419 = vadd.f32 %v404, 1.0
      %v420 = vadd.f32 %v406, 1.0
      %v421 = vadd.f32 %v408, 1.0
      %v422 = vadd.f32 %v410, 1.0
      %v423 = vadd.f32 %v412, 1.0
      %v424 = vadd.f32 %v414, 1.0
      %v425 = vadd.f32 %v416, 1.0
      %v426 = vadd.f32 %v418, 1.0
      %v427 = vrcp.pop %v419
      %v428 = vmul.f32 1.0, %v427
      %v429 = vrcp.pop %v420
      %v430 = vmul.f32 1.0, %v429
      %v431 = vrcp.pop %v421
      %v432 = vmul.f32 1.0, %v431
      %v433 = vrcp.pop %v422
      %v434 = vmul.f32 1.0, %v433
      %v435 = vrcp.pop %v423
      %v436 = vmul.f32 1.0, %v435
      %v437 = vrcp.pop %v424
      %v438 = vmul.f32 1.0, %v437
      %v439 = vrcp.pop %v425
      %v440 = vmul.f32 1.0, %v439
      %v441 = vrcp.pop %v426
      %v442 = vmul.f32 1.0, %v441
      %v443 = vmul.f32 %v365, %v428
      %v444 = vmul.f32 %v368, %v430
      %v445 = vmul.f32 %v373, %v432
      %v446 = vmul.f32 %v376, %v434
      %v447 = vmul.f32 %v381, %v436
      %v448 = vmul.f32 %v384, %v438
      %v449 = vmul.f32 %v389, %v440
      %v450 = vmul.f32 %v392, %v442
      %v451 = vpack.c.bf16 %v444, %v443
      %v452 = vpack.c.bf16 %v446, %v445
      %v453 = vpack.c.bf16 %v448, %v447
      %v454 = vpack.c.bf16 %v450, %v449
      %v455 = vld [vmem:[%s3] sm:$0xff]
      %v456 = vld [vmem:[%s3 + $0x8] sm:$0xff]
      %v457 = vld [vmem:[%s3 + $0x10] sm:$0xff]
      %v458 = vld [vmem:[%s3 + $0x18] sm:$0xff]
      %v459 = vld [vmem:[%s3 + $0x20] sm:$0xff]
      %v460 = vld [vmem:[%s3 + $0x28] sm:$0xff]
      %v461 = vld [vmem:[%s3 + $0x30] sm:$0xff]
      %v462 = vld [vmem:[%s3 + $0x38] sm:$0xff]
      %v463 = vld [vmem:[%s3 + $0x40] sm:$0xff]
      %v464 = vld [vmem:[%s3 + $0x48] sm:$0xff]
      %v465 = vld [vmem:[%s3 + $0x50] sm:$0xff]
      %v466 = vld [vmem:[%s3 + $0x58] sm:$0xff]
      %v467 = vld [vmem:[%s3 + $0x60] sm:$0xff]
      %v468 = vld [vmem:[%s3 + $0x68] sm:$0xff]
      %v469 = vld [vmem:[%s3 + $0x70] sm:$0xff]
      %v470 = vld [vmem:[%s3 + $0x78] sm:$0xff]
      %v471 = vld [vmem:[%s3 + $0x80] sm:$0xff]
      %v472 = vld [vmem:[%s3 + $0x88] sm:$0xff]
      %v473 = vld [vmem:[%s3 + $0x90] sm:$0xff]
      %v474 = vld [vmem:[%s3 + $0x98] sm:$0xff]
      %v475 = vld [vmem:[%s4] sm:$0xff]
      %v476 = vld [vmem:[%s4 + $0x8] sm:$0x3]
      %v479 = vlaneseq
      %v480 = vshrl.u32 %v479, 7
      %v481 = vsub.s32 0, %v480
      %v482 = vrot.slane %v475, %v481
      %v483 = vlaneseq
      %v484 = vshrl.u32 %v483, 7
      %v485 = vsub.s32 1, %v484
      %v486 = vrot.slane %v475, %v485
      %v487 = vlaneseq
      %v488 = vshrl.u32 %v487, 7
      %v489 = vsub.s32 2, %v488
      %v490 = vrot.slane %v475, %v489
      %v491 = vlaneseq
      %v492 = vshrl.u32 %v491, 7
      %v493 = vsub.s32 3, %v492
      %v494 = vrot.slane %v475, %v493
      %v495 = vlaneseq
      %v496 = vshrl.u32 %v495, 7
      %v497 = vsub.s32 4, %v496
      %v498 = vrot.slane %v475, %v497
      %v499 = vlaneseq
      %v500 = vshrl.u32 %v499, 7
      %v501 = vsub.s32 5, %v500
      %v502 = vrot.slane %v475, %v501
      %v503 = vlaneseq
      %v504 = vshrl.u32 %v503, 7
      %v505 = vsub.s32 6, %v504
      %v506 = vrot.slane %v475, %v505
      %v507 = vlaneseq
      %v508 = vshrl.u32 %v507, 7
      %v509 = vsub.s32 7, %v508
      %v510 = vrot.slane %v475, %v509
      %v511 = vlaneseq
      %v512 = vshrl.u32 %v511, 7
      %v513 = vsub.s32 0, %v512
      %v514 = vrot.slane %v476, %v513
      %v515 = vlaneseq
      %v516 = vshrl.u32 %v515, 7
      %v517 = vsub.s32 1, %v516
      %v518 = vrot.slane %v476, %v517
      %v549 = vunpack.c.l.b16 %v455
      %v550 = vunpack.c.h.b16 %v455
      %v551 = vunpack.c.l.b16 %v456
      %v552 = vunpack.c.h.b16 %v456
      %v553 = vunpack.c.l.b16 %v457
      %v554 = vunpack.c.h.b16 %v457
      %v555 = vunpack.c.l.b16 %v458
      %v556 = vunpack.c.h.b16 %v458
      %v557 = vunpack.c.l.b16 %v459
      %v558 = vunpack.c.h.b16 %v459
      %v559 = vunpack.c.l.b16 %v460
      %v560 = vunpack.c.h.b16 %v460
      %v561 = vunpack.c.l.b16 %v461
      %v562 = vunpack.c.h.b16 %v461
      %v563 = vunpack.c.l.b16 %v462
      %v564 = vunpack.c.h.b16 %v462
      %v565 = vunpack.c.l.b16 %v463
      %v566 = vunpack.c.h.b16 %v463
      %v567 = vunpack.c.l.b16 %v464
      %v568 = vunpack.c.h.b16 %v464
      %v569 = vunpack.c.l.b16 %v465
      %v570 = vunpack.c.h.b16 %v465
      %v571 = vunpack.c.l.b16 %v466
      %v572 = vunpack.c.h.b16 %v466
      %v573 = vunpack.c.l.b16 %v467
      %v574 = vunpack.c.h.b16 %v467
      %v575 = vunpack.c.l.b16 %v468
      %v576 = vunpack.c.h.b16 %v468
      %v577 = vunpack.c.l.b16 %v469
      %v578 = vunpack.c.h.b16 %v469
      %v579 = vunpack.c.l.b16 %v470
      %v580 = vunpack.c.h.b16 %v470
      %v581 = vunpack.c.l.b16 %v471
      %v582 = vunpack.c.h.b16 %v471
      %v583 = vunpack.c.l.b16 %v472
      %v584 = vunpack.c.h.b16 %v472
      %v585 = vunpack.c.l.b16 %v473
      %v586 = vunpack.c.h.b16 %v473
      %v587 = vunpack.c.l.b16 %v474
      %v588 = vunpack.c.h.b16 %v474
      %v589 = vpack.c.b16 %v559, %v549
      %v590 = vpack.c.b16 %v560, %v550
      %v591 = vpack.c.b16 %v561, %v551
      %v592 = vpack.c.b16 %v562, %v552
      %v593 = vpack.c.b16 %v563, %v553
      %v594 = vpack.c.b16 %v564, %v554
      %v595 = vpack.c.b16 %v565, %v555
      %v596 = vpack.c.b16 %v566, %v556
      %v597 = vpack.c.b16 %v567, %v557
      %v598 = vpack.c.b16 %v568, %v558
      %v599 = vpack.c.b16 %v579, %v569
      %v600 = vpack.c.b16 %v580, %v570
      %v601 = vpack.c.b16 %v581, %v571
      %v602 = vpack.c.b16 %v582, %v572
      %v603 = vpack.c.b16 %v583, %v573
      %v604 = vpack.c.b16 %v584, %v574
      %v605 = vpack.c.b16 %v585, %v575
      %v606 = vpack.c.b16 %v586, %v576
      %v607 = vpack.c.b16 %v587, %v577
      %v608 = vpack.c.b16 %v588, %v578
      %v630 = vsel %vm317, %v451, 0
      %v633 = vsel %vm317, %v452, 0
      %v636 = vsel %vm317, %v453, 0
      %v639 = vsel %vm317, %v454, 0
      %641 = vmatprep.subr.bf16.mxu0 %v590
      %642 = vmatpush1.bf16.msra.mxu0 %v589
      %643 = vmatprep.subr.bf16.mxu0 %v600
      %644 = vmatpush1.bf16.msra.mxu0 %v599
      %645 = vmatprep.subr.bf16.mxu0 0
      %646 = vmatpush1.bf16.msra.mxu0 0
      %647 = vmatprep.subr.bf16.mxu0 0
      %648 = vmatpush1.bf16.msra.mxu0 0
      %649 = vmatprep.subr.bf16.mxu0 0
      %650 = vmatpush1.bf16.msra.mxu0 0
      %651 = vmatprep.subr.bf16.mxu0 0
      %652 = vmatpush1.bf16.msra.mxu0 0
      %653 = vmatprep.subr.bf16.mxu0 0
      %654 = vmatpush1.bf16.msra.mxu0 0
      %655 = vmatprep.subr.bf16.mxu0 0
      %656 = vmatpush1.bf16.msra.mxu0 0
      %657 = vmatprep.subr.bf16.mxu0 0
      %658 = vmatpush1.bf16.msra.mxu0 0
      %659 = vmatprep.subr.bf16.mxu0 0
      %660 = vmatpush1.bf16.msra.mxu0 0
      %661 = vmatprep.subr.bf16.mxu0 0
      %662 = vmatpush1.bf16.msra.mxu0 0
      %663 = vmatprep.subr.bf16.mxu0 0
      %664 = vmatpush1.bf16.msra.mxu0 0
      %665 = vmatprep.subr.bf16.mxu0 0
      %666 = vmatpush1.bf16.msra.mxu0 0
      %667 = vmatprep.subr.bf16.mxu0 0
      %668 = vmatpush1.bf16.msra.mxu0 0
      %669 = vmatprep.subr.bf16.mxu0 0
      %670 = vmatpush1.bf16.msra.mxu0 0
      %671 = vmatprep.subr.bf16.mxu0 0
      %672 = vmatpush1.bf16.msra.mxu0 0
      %673 = vmatprep.mubr.bf16.mxu0 0
      %674 = vmatmul.mubr.bf16.gmra.mrb[0].mxu0 %v630
      %v675 = vpop.f32.mrb[0].mxu0
      %v676 = vadd.f32 %v482, %v675
      %v677 = vpop.f32.mrb[0].mxu0
      %v678 = vadd.f32 %v486, %v677
      %v679 = vpop.f32.mrb[0].mxu0
      %v680 = vadd.f32 %v482, %v679
      %v681 = vpop.f32.mrb[0].mxu0
      %v682 = vadd.f32 %v486, %v681
      %683 = vmatprep.mubr.bf16.mxu0 0
      %684 = vmatmul.mubr.bf16.gmra.mrb[0].mxu0 %v633
      %v685 = vpop.f32.mrb[0].mxu0
      %v686 = vadd.f32 %v482, %v685
      %v687 = vpop.f32.mrb[0].mxu0
      %v688 = vadd.f32 %v486, %v687
      %v689 = vpop.f32.mrb[0].mxu0
      %v690 = vadd.f32 %v482, %v689
      %v691 = vpop.f32.mrb[0].mxu0
      %v692 = vadd.f32 %v486, %v691
      %693 = vmatprep.mubr.bf16.mxu0 0
      %694 = vmatmul.mubr.bf16.gmra.mrb[0].mxu0 %v636
      %v695 = vpop.f32.mrb[0].mxu0
      %v696 = vadd.f32 %v482, %v695
      %v697 = vpop.f32.mrb[0].mxu0
      %v698 = vadd.f32 %v486, %v697
      %v699 = vpop.f32.mrb[0].mxu0
      %v700 = vadd.f32 %v482, %v699
      %v701 = vpop.f32.mrb[0].mxu0
      %v702 = vadd.f32 %v486, %v701
      %703 = vmatprep.mubr.bf16.mxu0 0
      %704 = vmatmul.mubr.bf16.gmra.mrb[0].mxu0 %v639
      %v705 = vpop.f32.mrb[0].mxu0
      %v706 = vadd.f32 %v482, %v705
      %v707 = vpop.f32.mrb[0].mxu0
      %v708 = vadd.f32 %v486, %v707
      %v709 = vpop.f32.mrb[0].mxu0
      %v710 = vadd.f32 %v482, %v709
      %v711 = vpop.f32.mrb[0].mxu0
      %v712 = vadd.f32 %v486, %v711
      %713 = vdwg.mxu0
      %714 = vmatprep.subr.bf16.mxu0 %v592
      %715 = vmatpush1.bf16.msra.mxu0 %v591
      %716 = vmatprep.subr.bf16.mxu0 %v602
      %717 = vmatpush1.bf16.msra.mxu0 %v601
      %718 = vmatprep.subr.bf16.mxu0 0
      %719 = vmatpush1.bf16.msra.mxu0 0
      %720 = vmatprep.subr.bf16.mxu0 0
      %721 = vmatpush1.bf16.msra.mxu0 0
      %722 = vmatprep.subr.bf16.mxu0 0
      %723 = vmatpush1.bf16.msra.mxu0 0
      %724 = vmatprep.subr.bf16.mxu0 0
      %725 = vmatpush1.bf16.msra.mxu0 0
      %726 = vmatprep.subr.bf16.mxu0 0
      %727 = vmatpush1.bf16.msra.mxu0 0
      %728 = vmatprep.subr.bf16.mxu0 0
      %729 = vmatpush1.bf16.msra.mxu0 0
      %730 = vmatprep.subr.bf16.mxu0 0
      %731 = vmatpush1.bf16.msra.mxu0 0
      %732 = vmatprep.subr.bf16.mxu0 0
      %733 = vmatpush1.bf16.msra.mxu0 0
      %734 = vmatprep.subr.bf16.mxu0 0
      %735 = vmatpush1.bf16.msra.mxu0 0
      %736 = vmatprep.subr.bf16.mxu0 0
      %737 = vmatpush1.bf16.msra.mxu0 0
      %738 = vmatprep.subr.bf16.mxu0 0
      %739 = vmatpush1.bf16.msra.mxu0 0
      %740 = vmatprep.subr.bf16.mxu0 0
      %741 = vmatpush1.bf16.msra.mxu0 0
      %742 = vmatprep.subr.bf16.mxu0 0
      %743 = vmatpush1.bf16.msra.mxu0 0
      %744 = vmatprep.subr.bf16.mxu0 0
      %745 = vmatpush1.bf16.msra.mxu0 0
      %746 = vmatprep.mubr.bf16.mxu0 0
      %747 = vmatmul.mubr.bf16.gmra.mrb[0].mxu0 %v630
      %v748 = vpop.f32.mrb[0].mxu0
      %v749 = vadd.f32 %v490, %v748
      %v750 = vpop.f32.mrb[0].mxu0
      %v751 = vadd.f32 %v494, %v750
      %v752 = vpop.f32.mrb[0].mxu0
      %v753 = vadd.f32 %v490, %v752
      %v754 = vpop.f32.mrb[0].mxu0
      %v755 = vadd.f32 %v494, %v754
      %756 = vmatprep.mubr.bf16.mxu0 0
      %757 = vmatmul.mubr.bf16.gmra.mrb[0].mxu0 %v633
      %v758 = vpop.f32.mrb[0].mxu0
      %v759 = vadd.f32 %v490, %v758
      %v760 = vpop.f32.mrb[0].mxu0
      %v761 = vadd.f32 %v494, %v760
      %v762 = vpop.f32.mrb[0].mxu0
      %v763 = vadd.f32 %v490, %v762
      %v764 = vpop.f32.mrb[0].mxu0
      %v765 = vadd.f32 %v494, %v764
      %766 = vmatprep.mubr.bf16.mxu0 0
      %767 = vmatmul.mubr.bf16.gmra.mrb[0].mxu0 %v636
      %v768 = vpop.f32.mrb[0].mxu0
      %v769 = vadd.f32 %v490, %v768
      %v770 = vpop.f32.mrb[0].mxu0
      %v771 = vadd.f32 %v494, %v770
      %v772 = vpop.f32.mrb[0].mxu0
      %v773 = vadd.f32 %v490, %v772
      %v774 = vpop.f32.mrb[0].mxu0
      %v775 = vadd.f32 %v494, %v774
      %776 = vmatprep.mubr.bf16.mxu0 0
      %777 = vmatmul.mubr.bf16.gmra.mrb[0].mxu0 %v639
      %v778 = vpop.f32.mrb[0].mxu0
      %v779 = vadd.f32 %v490, %v778
      %v780 = vpop.f32.mrb[0].mxu0
      %v781 = vadd.f32 %v494, %v780
      %v782 = vpop.f32.mrb[0].mxu0
      %v783 = vadd.f32 %v490, %v782
      %v784 = vpop.f32.mrb[0].mxu0
      %v785 = vadd.f32 %v494, %v784
      %786 = vdwg.mxu0
      %787 = vmatprep.subr.bf16.mxu0 %v594
      %788 = vmatpush1.bf16.msra.mxu0 %v593
      %789 = vmatprep.subr.bf16.mxu0 %v604
      %790 = vmatpush1.bf16.msra.mxu0 %v603
      %791 = vmatprep.subr.bf16.mxu0 0
      %792 = vmatpush1.bf16.msra.mxu0 0
      %793 = vmatprep.subr.bf16.mxu0 0
      %794 = vmatpush1.bf16.msra.mxu0 0
      %795 = vmatprep.subr.bf16.mxu0 0
      %796 = vmatpush1.bf16.msra.mxu0 0
      %797 = vmatprep.subr.bf16.mxu0 0
      %798 = vmatpush1.bf16.msra.mxu0 0
      %799 = vmatprep.subr.bf16.mxu0 0
      %800 = vmatpush1.bf16.msra.mxu0 0
      %801 = vmatprep.subr.bf16.mxu0 0
      %802 = vmatpush1.bf16.msra.mxu0 0
      %803 = vmatprep.subr.bf16.mxu0 0
      %804 = vmatpush1.bf16.msra.mxu0 0
      %805 = vmatprep.subr.bf16.mxu0 0
      %806 = vmatpush1.bf16.msra.mxu0 0
      %807 = vmatprep.subr.bf16.mxu0 0
      %808 = vmatpush1.bf16.msra.mxu0 0
      %809 = vmatprep.subr.bf16.mxu0 0
      %810 = vmatpush1.bf16.msra.mxu0 0
      %811 = vmatprep.subr.bf16.mxu0 0
      %812 = vmatpush1.bf16.msra.mxu0 0
      %813 = vmatprep.subr.bf16.mxu0 0
      %814 = vmatpush1.bf16.msra.mxu0 0
      %815 = vmatprep.subr.bf16.mxu0 0
      %816 = vmatpush1.bf16.msra.mxu0 0
      %817 = vmatprep.subr.bf16.mxu0 0
      %818 = vmatpush1.bf16.msra.mxu0 0
      %819 = vmatprep.mubr.bf16.mxu0 0
      %820 = vmatmul.mubr.bf16.gmra.mrb[0].mxu0 %v630
      %v821 = vpop.f32.mrb[0].mxu0
      %v822 = vadd.f32 %v498, %v821
      %v823 = vpop.f32.mrb[0].mxu0
      %v824 = vadd.f32 %v502, %v823
      %v825 = vpop.f32.mrb[0].mxu0
      %v826 = vadd.f32 %v498, %v825
      %v827 = vpop.f32.mrb[0].mxu0
      %v828 = vadd.f32 %v502, %v827
      %829 = vmatprep.mubr.bf16.mxu0 0
      %830 = vmatmul.mubr.bf16.gmra.mrb[0].mxu0 %v633
      %v831 = vpop.f32.mrb[0].mxu0
      %v832 = vadd.f32 %v498, %v831
      %v833 = vpop.f32.mrb[0].mxu0
      %v834 = vadd.f32 %v502, %v833
      %v835 = vpop.f32.mrb[0].mxu0
      %v836 = vadd.f32 %v498, %v835
      %v837 = vpop.f32.mrb[0].mxu0
      %v838 = vadd.f32 %v502, %v837
      %839 = vmatprep.mubr.bf16.mxu0 0
      %840 = vmatmul.mubr.bf16.gmra.mrb[0].mxu0 %v636
      %v841 = vpop.f32.mrb[0].mxu0
      %v842 = vadd.f32 %v498, %v841
      %v843 = vpop.f32.mrb[0].mxu0
      %v844 = vadd.f32 %v502, %v843
      %v845 = vpop.f32.mrb[0].mxu0
      %v846 = vadd.f32 %v498, %v845
      %v847 = vpop.f32.mrb[0].mxu0
      %v848 = vadd.f32 %v502, %v847
      %849 = vmatprep.mubr.bf16.mxu0 0
      %850 = vmatmul.mubr.bf16.gmra.mrb[0].mxu0 %v639
      %v851 = vpop.f32.mrb[0].mxu0
      %v852 = vadd.f32 %v498, %v851
      %v853 = vpop.f32.mrb[0].mxu0
      %v854 = vadd.f32 %v502, %v853
      %v855 = vpop.f32.mrb[0].mxu0
      %v856 = vadd.f32 %v498, %v855
      %v857 = vpop.f32.mrb[0].mxu0
      %v858 = vadd.f32 %v502, %v857
      %859 = vdwg.mxu0
      %860 = vmatprep.subr.bf16.mxu0 %v596
      %861 = vmatpush1.bf16.msra.mxu0 %v595
      %862 = vmatprep.subr.bf16.mxu0 %v606
      %863 = vmatpush1.bf16.msra.mxu0 %v605
      %864 = vmatprep.subr.bf16.mxu0 0
      %865 = vmatpush1.bf16.msra.mxu0 0
      %866 = vmatprep.subr.bf16.mxu0 0
      %867 = vmatpush1.bf16.msra.mxu0 0
      %868 = vmatprep.subr.bf16.mxu0 0
      %869 = vmatpush1.bf16.msra.mxu0 0
      %870 = vmatprep.subr.bf16.mxu0 0
      %871 = vmatpush1.bf16.msra.mxu0 0
      %872 = vmatprep.subr.bf16.mxu0 0
      %873 = vmatpush1.bf16.msra.mxu0 0
      %874 = vmatprep.subr.bf16.mxu0 0
      %875 = vmatpush1.bf16.msra.mxu0 0
      %876 = vmatprep.subr.bf16.mxu0 0
      %877 = vmatpush1.bf16.msra.mxu0 0
      %878 = vmatprep.subr.bf16.mxu0 0
      %879 = vmatpush1.bf16.msra.mxu0 0
      %880 = vmatprep.subr.bf16.mxu0 0
      %881 = vmatpush1.bf16.msra.mxu0 0
      %882 = vmatprep.subr.bf16.mxu0 0
      %883 = vmatpush1.bf16.msra.mxu0 0
      %884 = vmatprep.subr.bf16.mxu0 0
      %885 = vmatpush1.bf16.msra.mxu0 0
      %886 = vmatprep.subr.bf16.mxu0 0
      %887 = vmatpush1.bf16.msra.mxu0 0
      %888 = vmatprep.subr.bf16.mxu0 0
      %889 = vmatpush1.bf16.msra.mxu0 0
      %890 = vmatprep.subr.bf16.mxu0 0
      %891 = vmatpush1.bf16.msra.mxu0 0
      %892 = vmatprep.mubr.bf16.mxu0 0
      %893 = vmatmul.mubr.bf16.gmra.mrb[0].mxu0 %v630
      %v894 = vpop.f32.mrb[0].mxu0
      %v895 = vadd.f32 %v506, %v894
      %v896 = vpop.f32.mrb[0].mxu0
      %v897 = vadd.f32 %v510, %v896
      %v898 = vpop.f32.mrb[0].mxu0
      %v899 = vadd.f32 %v506, %v898
      %v900 = vpop.f32.mrb[0].mxu0
      %v901 = vadd.f32 %v510, %v900
      %902 = vmatprep.mubr.bf16.mxu0 0
      %903 = vmatmul.mubr.bf16.gmra.mrb[0].mxu0 %v633
      %v904 = vpop.f32.mrb[0].mxu0
      %v905 = vadd.f32 %v506, %v904
      %v906 = vpop.f32.mrb[0].mxu0
      %v907 = vadd.f32 %v510, %v906
      %v908 = vpop.f32.mrb[0].mxu0
      %v909 = vadd.f32 %v506, %v908
      %v910 = vpop.f32.mrb[0].mxu0
      %v911 = vadd.f32 %v510, %v910
      %912 = vmatprep.mubr.bf16.mxu0 0
      %913 = vmatmul.mubr.bf16.gmra.mrb[0].mxu0 %v636
      %v914 = vpop.f32.mrb[0].mxu0
      %v915 = vadd.f32 %v506, %v914
      %v916 = vpop.f32.mrb[0].mxu0
      %v917 = vadd.f32 %v510, %v916
      %v918 = vpop.f32.mrb[0].mxu0
      %v919 = vadd.f32 %v506, %v918
      %v920 = vpop.f32.mrb[0].mxu0
      %v921 = vadd.f32 %v510, %v920
      %922 = vmatprep.mubr.bf16.mxu0 0
      %923 = vmatmul.mubr.bf16.gmra.mrb[0].mxu0 %v639
      %v924 = vpop.f32.mrb[0].mxu0
      %v925 = vadd.f32 %v506, %v924
      %v926 = vpop.f32.mrb[0].mxu0
      %v927 = vadd.f32 %v510, %v926
      %v928 = vpop.f32.mrb[0].mxu0
      %v929 = vadd.f32 %v506, %v928
      %v930 = vpop.f32.mrb[0].mxu0
      %v931 = vadd.f32 %v510, %v930
      %932 = vdwg.mxu0
      %933 = vmatprep.subr.bf16.mxu0 %v598
      %934 = vmatpush1.bf16.msra.mxu0 %v597
      %935 = vmatprep.subr.bf16.mxu0 %v608
      %936 = vmatpush1.bf16.msra.mxu0 %v607
      %937 = vmatprep.subr.bf16.mxu0 0
      %938 = vmatpush1.bf16.msra.mxu0 0
      %939 = vmatprep.subr.bf16.mxu0 0
      %940 = vmatpush1.bf16.msra.mxu0 0
      %941 = vmatprep.subr.bf16.mxu0 0
      %942 = vmatpush1.bf16.msra.mxu0 0
      %943 = vmatprep.subr.bf16.mxu0 0
      %944 = vmatpush1.bf16.msra.mxu0 0
      %945 = vmatprep.subr.bf16.mxu0 0
      %946 = vmatpush1.bf16.msra.mxu0 0
      %947 = vmatprep.subr.bf16.mxu0 0
      %948 = vmatpush1.bf16.msra.mxu0 0
      %949 = vmatprep.subr.bf16.mxu0 0
      %950 = vmatpush1.bf16.msra.mxu0 0
      %951 = vmatprep.subr.bf16.mxu0 0
      %952 = vmatpush1.bf16.msra.mxu0 0
      %953 = vmatprep.subr.bf16.mxu0 0
      %954 = vmatpush1.bf16.msra.mxu0 0
      %955 = vmatprep.subr.bf16.mxu0 0
      %956 = vmatpush1.bf16.msra.mxu0 0
      %957 = vmatprep.subr.bf16.mxu0 0
      %958 = vmatpush1.bf16.msra.mxu0 0
      %959 = vmatprep.subr.bf16.mxu0 0
      %960 = vmatpush1.bf16.msra.mxu0 0
      %961 = vmatprep.subr.bf16.mxu0 0
      %962 = vmatpush1.bf16.msra.mxu0 0
      %963 = vmatprep.subr.bf16.mxu0 0
      %964 = vmatpush1.bf16.msra.mxu0 0
      %965 = vmatprep.mubr.bf16.mxu0 0
      %966 = vmatmul.mubr.bf16.gmra.mrb[0].mxu0 %v630
      %v967 = vpop.f32.mrb[0].mxu0
      %v968 = vadd.f32 %v514, %v967
      %v969 = vpop.f32.mrb[0].mxu0
      %v970 = vadd.f32 %v518, %v969
      %v971 = vpop.f32.mrb[0].mxu0
      %v972 = vadd.f32 %v514, %v971
      %v973 = vpop.f32.mrb[0].mxu0
      %v974 = vadd.f32 %v518, %v973
      %975 = vmatprep.mubr.bf16.mxu0 0
      %976 = vmatmul.mubr.bf16.gmra.mrb[0].mxu0 %v633
      %v977 = vpop.f32.mrb[0].mxu0
      %v978 = vadd.f32 %v514, %v977
      %v979 = vpop.f32.mrb[0].mxu0
      %v980 = vadd.f32 %v518, %v979
      %v981 = vpop.f32.mrb[0].mxu0
      %v982 = vadd.f32 %v514, %v981
      %v983 = vpop.f32.mrb[0].mxu0
      %v984 = vadd.f32 %v518, %v983
      %985 = vmatprep.mubr.bf16.mxu0 0
      %986 = vmatmul.mubr.bf16.gmra.mrb[0].mxu0 %v636
      %v987 = vpop.f32.mrb[0].mxu0
      %v988 = vadd.f32 %v514, %v987
      %v989 = vpop.f32.mrb[0].mxu0
      %v990 = vadd.f32 %v518, %v989
      %v991 = vpop.f32.mrb[0].mxu0
      %v992 = vadd.f32 %v514, %v991
      %v993 = vpop.f32.mrb[0].mxu0
      %v994 = vadd.f32 %v518, %v993
      %995 = vmatprep.mubr.bf16.mxu0 0
      %996 = vmatmul.mubr.bf16.gmra.mrb[0].mxu0 %v639
      %v997 = vpop.f32.mrb[0].mxu0
      %v998 = vadd.f32 %v514, %v997
      %v999 = vpop.f32.mrb[0].mxu0
      %v1000 = vadd.f32 %v518, %v999
      %v1001 = vpop.f32.mrb[0].mxu0
      %v1002 = vadd.f32 %v514, %v1001
      %v1003 = vpop.f32.mrb[0].mxu0
      %v1004 = vadd.f32 %v518, %v1003
      %1005 = vdwg.mxu0
      %v1006 = vxor.u32 %v676, 2147483648
      %v1007 = vxor.u32 %v678, 2147483648
      %v1008 = vxor.u32 %v749, 2147483648
      %v1009 = vxor.u32 %v751, 2147483648
      %v1010 = vxor.u32 %v822, 2147483648
      %v1011 = vxor.u32 %v824, 2147483648
      %v1012 = vxor.u32 %v895, 2147483648
      %v1013 = vxor.u32 %v897, 2147483648
      %v1014 = vxor.u32 %v968, 2147483648
      %v1015 = vxor.u32 %v970, 2147483648
      %v1016 = vxor.u32 %v680, 2147483648
      %v1017 = vxor.u32 %v682, 2147483648
      %v1018 = vxor.u32 %v753, 2147483648
      %v1019 = vxor.u32 %v755, 2147483648
      %v1020 = vxor.u32 %v826, 2147483648
      %v1021 = vxor.u32 %v828, 2147483648
      %v1022 = vxor.u32 %v899, 2147483648
      %v1023 = vxor.u32 %v901, 2147483648
      %v1024 = vxor.u32 %v972, 2147483648
      %v1025 = vxor.u32 %v974, 2147483648
      %v1026 = vxor.u32 %v686, 2147483648
      %v1027 = vxor.u32 %v688, 2147483648
      %v1028 = vxor.u32 %v759, 2147483648
      %v1029 = vxor.u32 %v761, 2147483648
      %v1030 = vxor.u32 %v832, 2147483648
      %v1031 = vxor.u32 %v834, 2147483648
      %v1032 = vxor.u32 %v905, 2147483648
      %v1033 = vxor.u32 %v907, 2147483648
      %v1034 = vxor.u32 %v978, 2147483648
      %v1035 = vxor.u32 %v980, 2147483648
      %v1036 = vxor.u32 %v690, 2147483648
      %v1037 = vxor.u32 %v692, 2147483648
      %v1038 = vxor.u32 %v763, 2147483648
      %v1039 = vxor.u32 %v765, 2147483648
      %v1040 = vxor.u32 %v836, 2147483648
      %v1041 = vxor.u32 %v838, 2147483648
      %v1042 = vxor.u32 %v909, 2147483648
      %v1043 = vxor.u32 %v911, 2147483648
      %v1044 = vxor.u32 %v982, 2147483648
      %v1045 = vxor.u32 %v984, 2147483648
      %v1046 = vxor.u32 %v696, 2147483648
      %v1047 = vxor.u32 %v698, 2147483648
      %v1048 = vxor.u32 %v769, 2147483648
      %v1049 = vxor.u32 %v771, 2147483648
      %v1050 = vxor.u32 %v842, 2147483648
      %v1051 = vxor.u32 %v844, 2147483648
      %v1052 = vxor.u32 %v915, 2147483648
      %v1053 = vxor.u32 %v917, 2147483648
      %v1054 = vxor.u32 %v988, 2147483648
      %v1055 = vxor.u32 %v990, 2147483648
      %v1056 = vxor.u32 %v700, 2147483648
      %v1057 = vxor.u32 %v702, 2147483648
      %v1058 = vxor.u32 %v773, 2147483648
      %v1059 = vxor.u32 %v775, 2147483648
      %v1060 = vxor.u32 %v846, 2147483648
      %v1061 = vxor.u32 %v848, 2147483648
      %v1062 = vxor.u32 %v919, 2147483648
      %v1063 = vxor.u32 %v921, 2147483648
      %v1064 = vxor.u32 %v992, 2147483648
      %v1065 = vxor.u32 %v994, 2147483648
      %v1066 = vxor.u32 %v706, 2147483648
      %v1067 = vxor.u32 %v708, 2147483648
      %v1068 = vxor.u32 %v779, 2147483648
      %v1069 = vxor.u32 %v781, 2147483648
      %v1070 = vxor.u32 %v852, 2147483648
      %v1071 = vxor.u32 %v854, 2147483648
      %v1072 = vxor.u32 %v925, 2147483648
      %v1073 = vxor.u32 %v927, 2147483648
      %v1074 = vxor.u32 %v998, 2147483648
      %v1075 = vxor.u32 %v1000, 2147483648
      %v1076 = vxor.u32 %v710, 2147483648
      %v1077 = vxor.u32 %v712, 2147483648
      %v1078 = vxor.u32 %v783, 2147483648
      %v1079 = vxor.u32 %v785, 2147483648
      %v1080 = vxor.u32 %v856, 2147483648
      %v1081 = vxor.u32 %v858, 2147483648
      %v1082 = vxor.u32 %v929, 2147483648
      %v1083 = vxor.u32 %v931, 2147483648
      %v1084 = vxor.u32 %v1002, 2147483648
      %v1085 = vxor.u32 %v1004, 2147483648
      %v1086 = vmul.f32 %v1006, 1.442695
      %v1087 = vpow.pop %v1086
      %v1088 = vmul.f32 %v1007, 1.442695
      %v1089 = vpow.pop %v1088
      %v1090 = vmul.f32 %v1008, 1.442695
      %v1091 = vpow.pop %v1090
      %v1092 = vmul.f32 %v1009, 1.442695
      %v1093 = vpow.pop %v1092
      %v1094 = vmul.f32 %v1010, 1.442695
      %v1095 = vpow.pop %v1094
      %v1096 = vmul.f32 %v1011, 1.442695
      %v1097 = vpow.pop %v1096
      %v1098 = vmul.f32 %v1012, 1.442695
      %v1099 = vpow.pop %v1098
      %v1100 = vmul.f32 %v1013, 1.442695
      %v1101 = vpow.pop %v1100
      %v1102 = vmul.f32 %v1014, 1.442695
      %v1103 = vpow.pop %v1102
      %v1104 = vmul.f32 %v1015, 1.442695
      %v1105 = vpow.pop %v1104
      %v1106 = vmul.f32 %v1016, 1.442695
      %v1107 = vpow.pop %v1106
      %v1108 = vmul.f32 %v1017, 1.442695
      %v1109 = vpow.pop %v1108
      %v1110 = vmul.f32 %v1018, 1.442695
      %v1111 = vpow.pop %v1110
      %v1112 = vmul.f32 %v1019, 1.442695
      %v1113 = vpow.pop %v1112
      %v1114 = vmul.f32 %v1020, 1.442695
      %v1115 = vpow.pop %v1114
      %v1116 = vmul.f32 %v1021, 1.442695
      %v1117 = vpow.pop %v1116
      %v1118 = vmul.f32 %v1022, 1.442695
      %v1119 = vpow.pop %v1118
      %v1120 = vmul.f32 %v1023, 1.442695
      %v1121 = vpow.pop %v1120
      %v1122 = vmul.f32 %v1024, 1.442695
      %v1123 = vpow.pop %v1122
      %v1124 = vmul.f32 %v1025, 1.442695
      %v1125 = vpow.pop %v1124
      %v1126 = vmul.f32 %v1026, 1.442695
      %v1127 = vpow.pop %v1126
      %v1128 = vmul.f32 %v1027, 1.442695
      %v1129 = vpow.pop %v1128
      %v1130 = vmul.f32 %v1028, 1.442695
      %v1131 = vpow.pop %v1130
      %v1132 = vmul.f32 %v1029, 1.442695
      %v1133 = vpow.pop %v1132
      %v1134 = vmul.f32 %v1030, 1.442695
      %v1135 = vpow.pop %v1134
      %v1136 = vmul.f32 %v1031, 1.442695
      %v1137 = vpow.pop %v1136
      %v1138 = vmul.f32 %v1032, 1.442695
      %v1139 = vpow.pop %v1138
      %v1140 = vmul.f32 %v1033, 1.442695
      %v1141 = vpow.pop %v1140
      %v1142 = vmul.f32 %v1034, 1.442695
      %v1143 = vpow.pop %v1142
      %v1144 = vmul.f32 %v1035, 1.442695
      %v1145 = vpow.pop %v1144
      %v1146 = vmul.f32 %v1036, 1.442695
      %v1147 = vpow.pop %v1146
      %v1148 = vmul.f32 %v1037, 1.442695
      %v1149 = vpow.pop %v1148
      %v1150 = vmul.f32 %v1038, 1.442695
      %v1151 = vpow.pop %v1150
      %v1152 = vmul.f32 %v1039, 1.442695
      %v1153 = vpow.pop %v1152
      %v1154 = vmul.f32 %v1040, 1.442695
      %v1155 = vpow.pop %v1154
      %v1156 = vmul.f32 %v1041, 1.442695
      %v1157 = vpow.pop %v1156
      %v1158 = vmul.f32 %v1042, 1.442695
      %v1159 = vpow.pop %v1158
      %v1160 = vmul.f32 %v1043, 1.442695
      %v1161 = vpow.pop %v1160
      %v1162 = vmul.f32 %v1044, 1.442695
      %v1163 = vpow.pop %v1162
      %v1164 = vmul.f32 %v1045, 1.442695
      %v1165 = vpow.pop %v1164
      %v1166 = vmul.f32 %v1046, 1.442695
      %v1167 = vpow.pop %v1166
      %v1168 = vmul.f32 %v1047, 1.442695
      %v1169 = vpow.pop %v1168
      %v1170 = vmul.f32 %v1048, 1.442695
      %v1171 = vpow.pop %v1170
      %v1172 = vmul.f32 %v1049, 1.442695
      %v1173 = vpow.pop %v1172
      %v1174 = vmul.f32 %v1050, 1.442695
      %v1175 = vpow.pop %v1174
      %v1176 = vmul.f32 %v1051, 1.442695
      %v1177 = vpow.pop %v1176
      %v1178 = vmul.f32 %v1052, 1.442695
      %v1179 = vpow.pop %v1178
      %v1180 = vmul.f32 %v1053, 1.442695
      %v1181 = vpow.pop %v1180
      %v1182 = vmul.f32 %v1054, 1.442695
      %v1183 = vpow.pop %v1182
      %v1184 = vmul.f32 %v1055, 1.442695
      %v1185 = vpow.pop %v1184
      %v1186 = vmul.f32 %v1056, 1.442695
      %v1187 = vpow.pop %v1186
      %v1188 = vmul.f32 %v1057, 1.442695
      %v1189 = vpow.pop %v1188
      %v1190 = vmul.f32 %v1058, 1.442695
      %v1191 = vpow.pop %v1190
      %v1192 = vmul.f32 %v1059, 1.442695
      %v1193 = vpow.pop %v1192
      %v1194 = vmul.f32 %v1060, 1.442695
      %v1195 = vpow.pop %v1194
      %v1196 = vmul.f32 %v1061, 1.442695
      %v1197 = vpow.pop %v1196
      %v1198 = vmul.f32 %v1062, 1.442695
      %v1199 = vpow.pop %v1198
      %v1200 = vmul.f32 %v1063, 1.442695
      %v1201 = vpow.pop %v1200
      %v1202 = vmul.f32 %v1064, 1.442695
      %v1203 = vpow.pop %v1202
      %v1204 = vmul.f32 %v1065, 1.442695
      %v1205 = vpow.pop %v1204
      %v1206 = vmul.f32 %v1066, 1.442695
      %v1207 = vpow.pop %v1206
      %v1208 = vmul.f32 %v1067, 1.442695
      %v1209 = vpow.pop %v1208
      %v1210 = vmul.f32 %v1068, 1.442695
      %v1211 = vpow.pop %v1210
      %v1212 = vmul.f32 %v1069, 1.442695
      %v1213 = vpow.pop %v1212
      %v1214 = vmul.f32 %v1070, 1.442695
      %v1215 = vpow.pop %v1214
      %v1216 = vmul.f32 %v1071, 1.442695
      %v1217 = vpow.pop %v1216
      %v1218 = vmul.f32 %v1072, 1.442695
      %v1219 = vpow.pop %v1218
      %v1220 = vmul.f32 %v1073, 1.442695
      %v1221 = vpow.pop %v1220
      %v1222 = vmul.f32 %v1074, 1.442695
      %v1223 = vpow.pop %v1222
      %v1224 = vmul.f32 %v1075, 1.442695
      %v1225 = vpow.pop %v1224
      %v1226 = vmul.f32 %v1076, 1.442695
      %v1227 = vpow.pop %v1226
      %v1228 = vmul.f32 %v1077, 1.442695
      %v1229 = vpow.pop %v1228
      %v1230 = vmul.f32 %v1078, 1.442695
      %v1231 = vpow.pop %v1230
      %v1232 = vmul.f32 %v1079, 1.442695
      %v1233 = vpow.pop %v1232
      %v1234 = vmul.f32 %v1080, 1.442695
      %v1235 = vpow.pop %v1234
      %v1236 = vmul.f32 %v1081, 1.442695
      %v1237 = vpow.pop %v1236
      %v1238 = vmul.f32 %v1082, 1.442695
      %v1239 = vpow.pop %v1238
      %v1240 = vmul.f32 %v1083, 1.442695
      %v1241 = vpow.pop %v1240
      %v1242 = vmul.f32 %v1084, 1.442695
      %v1243 = vpow.pop %v1242
      %v1244 = vmul.f32 %v1085, 1.442695
      %v1245 = vpow.pop %v1244
      %v1246 = vadd.f32 %v1087, 1.0
      %v1247 = vadd.f32 %v1089, 1.0
      %v1248 = vadd.f32 %v1091, 1.0
      %v1249 = vadd.f32 %v1093, 1.0
      %v1250 = vadd.f32 %v1095, 1.0
      %v1251 = vadd.f32 %v1097, 1.0
      %v1252 = vadd.f32 %v1099, 1.0
      %v1253 = vadd.f32 %v1101, 1.0
      %v1254 = vadd.f32 %v1103, 1.0
      %v1255 = vadd.f32 %v1105, 1.0
      %v1256 = vadd.f32 %v1107, 1.0
      %v1257 = vadd.f32 %v1109, 1.0
      %v1258 = vadd.f32 %v1111, 1.0
      %v1259 = vadd.f32 %v1113, 1.0
      %v1260 = vadd.f32 %v1115, 1.0
      %v1261 = vadd.f32 %v1117, 1.0
      %v1262 = vadd.f32 %v1119, 1.0
      %v1263 = vadd.f32 %v1121, 1.0
      %v1264 = vadd.f32 %v1123, 1.0
      %v1265 = vadd.f32 %v1125, 1.0
      %v1266 = vadd.f32 %v1127, 1.0
      %v1267 = vadd.f32 %v1129, 1.0
      %v1268 = vadd.f32 %v1131, 1.0
      %v1269 = vadd.f32 %v1133, 1.0
      %v1270 = vadd.f32 %v1135, 1.0
      %v1271 = vadd.f32 %v1137, 1.0
      %v1272 = vadd.f32 %v1139, 1.0
      %v1273 = vadd.f32 %v1141, 1.0
      %v1274 = vadd.f32 %v1143, 1.0
      %v1275 = vadd.f32 %v1145, 1.0
      %v1276 = vadd.f32 %v1147, 1.0
      %v1277 = vadd.f32 %v1149, 1.0
      %v1278 = vadd.f32 %v1151, 1.0
      %v1279 = vadd.f32 %v1153, 1.0
      %v1280 = vadd.f32 %v1155, 1.0
      %v1281 = vadd.f32 %v1157, 1.0
      %v1282 = vadd.f32 %v1159, 1.0
      %v1283 = vadd.f32 %v1161, 1.0
      %v1284 = vadd.f32 %v1163, 1.0
      %v1285 = vadd.f32 %v1165, 1.0
      %v1286 = vadd.f32 %v1167, 1.0
      %v1287 = vadd.f32 %v1169, 1.0
      %v1288 = vadd.f32 %v1171, 1.0
      %v1289 = vadd.f32 %v1173, 1.0
      %v1290 = vadd.f32 %v1175, 1.0
      %v1291 = vadd.f32 %v1177, 1.0
      %v1292 = vadd.f32 %v1179, 1.0
      %v1293 = vadd.f32 %v1181, 1.0
      %v1294 = vadd.f32 %v1183, 1.0
      %v1295 = vadd.f32 %v1185, 1.0
      %v1296 = vadd.f32 %v1187, 1.0
      %v1297 = vadd.f32 %v1189, 1.0
      %v1298 = vadd.f32 %v1191, 1.0
      %v1299 = vadd.f32 %v1193, 1.0
      %v1300 = vadd.f32 %v1195, 1.0
      %v1301 = vadd.f32 %v1197, 1.0
      %v1302 = vadd.f32 %v1199, 1.0
      %v1303 = vadd.f32 %v1201, 1.0
      %v1304 = vadd.f32 %v1203, 1.0
      %v1305 = vadd.f32 %v1205, 1.0
      %v1306 = vadd.f32 %v1207, 1.0
      %v1307 = vadd.f32 %v1209, 1.0
      %v1308 = vadd.f32 %v1211, 1.0
      %v1309 = vadd.f32 %v1213, 1.0
      %v1310 = vadd.f32 %v1215, 1.0
      %v1311 = vadd.f32 %v1217, 1.0
      %v1312 = vadd.f32 %v1219, 1.0
      %v1313 = vadd.f32 %v1221, 1.0
      %v1314 = vadd.f32 %v1223, 1.0
      %v1315 = vadd.f32 %v1225, 1.0
      %v1316 = vadd.f32 %v1227, 1.0
      %v1317 = vadd.f32 %v1229, 1.0
      %v1318 = vadd.f32 %v1231, 1.0
      %v1319 = vadd.f32 %v1233, 1.0
      %v1320 = vadd.f32 %v1235, 1.0
      %v1321 = vadd.f32 %v1237, 1.0
      %v1322 = vadd.f32 %v1239, 1.0
      %v1323 = vadd.f32 %v1241, 1.0
      %v1324 = vadd.f32 %v1243, 1.0
      %v1325 = vadd.f32 %v1245, 1.0
      %v1326 = vrcp.pop %v1246
      %v1327 = vmul.f32 1.0, %v1326
      %v1328 = vrcp.pop %v1247
      %v1329 = vmul.f32 1.0, %v1328
      %v1330 = vrcp.pop %v1248
      %v1331 = vmul.f32 1.0, %v1330
      %v1332 = vrcp.pop %v1249
      %v1333 = vmul.f32 1.0, %v1332
      %v1334 = vrcp.pop %v1250
      %v1335 = vmul.f32 1.0, %v1334
      %v1336 = vrcp.pop %v1251
      %v1337 = vmul.f32 1.0, %v1336
      %v1338 = vrcp.pop %v1252
      %v1339 = vmul.f32 1.0, %v1338
      %v1340 = vrcp.pop %v1253
      %v1341 = vmul.f32 1.0, %v1340
      %v1342 = vrcp.pop %v1254
      %v1343 = vmul.f32 1.0, %v1342
      %v1344 = vrcp.pop %v1255
      %v1345 = vmul.f32 1.0, %v1344
      %v1346 = vrcp.pop %v1256
      %v1347 = vmul.f32 1.0, %v1346
      %v1348 = vrcp.pop %v1257
      %v1349 = vmul.f32 1.0, %v1348
      %v1350 = vrcp.pop %v1258
      %v1351 = vmul.f32 1.0, %v1350
      %v1352 = vrcp.pop %v1259
      %v1353 = vmul.f32 1.0, %v1352
      %v1354 = vrcp.pop %v1260
      %v1355 = vmul.f32 1.0, %v1354
      %v1356 = vrcp.pop %v1261
      %v1357 = vmul.f32 1.0, %v1356
      %v1358 = vrcp.pop %v1262
      %v1359 = vmul.f32 1.0, %v1358
      %v1360 = vrcp.pop %v1263
      %v1361 = vmul.f32 1.0, %v1360
      %v1362 = vrcp.pop %v1264
      %v1363 = vmul.f32 1.0, %v1362
      %v1364 = vrcp.pop %v1265
      %v1365 = vmul.f32 1.0, %v1364
      %v1366 = vrcp.pop %v1266
      %v1367 = vmul.f32 1.0, %v1366
      %v1368 = vrcp.pop %v1267
      %v1369 = vmul.f32 1.0, %v1368
      %v1370 = vrcp.pop %v1268
      %v1371 = vmul.f32 1.0, %v1370
      %v1372 = vrcp.pop %v1269
      %v1373 = vmul.f32 1.0, %v1372
      %v1374 = vrcp.pop %v1270
      %v1375 = vmul.f32 1.0, %v1374
      %v1376 = vrcp.pop %v1271
      %v1377 = vmul.f32 1.0, %v1376
      %v1378 = vrcp.pop %v1272
      %v1379 = vmul.f32 1.0, %v1378
      %v1380 = vrcp.pop %v1273
      %v1381 = vmul.f32 1.0, %v1380
      %v1382 = vrcp.pop %v1274
      %v1383 = vmul.f32 1.0, %v1382
      %v1384 = vrcp.pop %v1275
      %v1385 = vmul.f32 1.0, %v1384
      %v1386 = vrcp.pop %v1276
      %v1387 = vmul.f32 1.0, %v1386
      %v1388 = vrcp.pop %v1277
      %v1389 = vmul.f32 1.0, %v1388
      %v1390 = vrcp.pop %v1278
      %v1391 = vmul.f32 1.0, %v1390
      %v1392 = vrcp.pop %v1279
      %v1393 = vmul.f32 1.0, %v1392
      %v1394 = vrcp.pop %v1280
      %v1395 = vmul.f32 1.0, %v1394
      %v1396 = vrcp.pop %v1281
      %v1397 = vmul.f32 1.0, %v1396
      %v1398 = vrcp.pop %v1282
      %v1399 = vmul.f32 1.0, %v1398
      %v1400 = vrcp.pop %v1283
      %v1401 = vmul.f32 1.0, %v1400
      %v1402 = vrcp.pop %v1284
      %v1403 = vmul.f32 1.0, %v1402
      %v1404 = vrcp.pop %v1285
      %v1405 = vmul.f32 1.0, %v1404
      %v1406 = vrcp.pop %v1286
      %v1407 = vmul.f32 1.0, %v1406
      %v1408 = vrcp.pop %v1287
      %v1409 = vmul.f32 1.0, %v1408
      %v1410 = vrcp.pop %v1288
      %v1411 = vmul.f32 1.0, %v1410
      %v1412 = vrcp.pop %v1289
      %v1413 = vmul.f32 1.0, %v1412
      %v1414 = vrcp.pop %v1290
      %v1415 = vmul.f32 1.0, %v1414
      %v1416 = vrcp.pop %v1291
      %v1417 = vmul.f32 1.0, %v1416
      %v1418 = vrcp.pop %v1292
      %v1419 = vmul.f32 1.0, %v1418
      %v1420 = vrcp.pop %v1293
      %v1421 = vmul.f32 1.0, %v1420
      %v1422 = vrcp.pop %v1294
      %v1423 = vmul.f32 1.0, %v1422
      %v1424 = vrcp.pop %v1295
      %v1425 = vmul.f32 1.0, %v1424
      %v1426 = vrcp.pop %v1296
      %v1427 = vmul.f32 1.0, %v1426
      %v1428 = vrcp.pop %v1297
      %v1429 = vmul.f32 1.0, %v1428
      %v1430 = vrcp.pop %v1298
      %v1431 = vmul.f32 1.0, %v1430
      %v1432 = vrcp.pop %v1299
      %v1433 = vmul.f32 1.0, %v1432
      %v1434 = vrcp.pop %v1300
      %v1435 = vmul.f32 1.0, %v1434
      %v1436 = vrcp.pop %v1301
      %v1437 = vmul.f32 1.0, %v1436
      %v1438 = vrcp.pop %v1302
      %v1439 = vmul.f32 1.0, %v1438
      %v1440 = vrcp.pop %v1303
      %v1441 = vmul.f32 1.0, %v1440
      %v1442 = vrcp.pop %v1304
      %v1443 = vmul.f32 1.0, %v1442
      %v1444 = vrcp.pop %v1305
      %v1445 = vmul.f32 1.0, %v1444
      %v1446 = vrcp.pop %v1306
      %v1447 = vmul.f32 1.0, %v1446
      %v1448 = vrcp.pop %v1307
      %v1449 = vmul.f32 1.0, %v1448
      %v1450 = vrcp.pop %v1308
      %v1451 = vmul.f32 1.0, %v1450
      %v1452 = vrcp.pop %v1309
      %v1453 = vmul.f32 1.0, %v1452
      %v1454 = vrcp.pop %v1310
      %v1455 = vmul.f32 1.0, %v1454
      %v1456 = vrcp.pop %v1311
      %v1457 = vmul.f32 1.0, %v1456
      %v1458 = vrcp.pop %v1312
      %v1459 = vmul.f32 1.0, %v1458
      %v1460 = vrcp.pop %v1313
      %v1461 = vmul.f32 1.0, %v1460
      %v1462 = vrcp.pop %v1314
      %v1463 = vmul.f32 1.0, %v1462
      %v1464 = vrcp.pop %v1315
      %v1465 = vmul.f32 1.0, %v1464
      %v1466 = vrcp.pop %v1316
      %v1467 = vmul.f32 1.0, %v1466
      %v1468 = vrcp.pop %v1317
      %v1469 = vmul.f32 1.0, %v1468
      %v1470 = vrcp.pop %v1318
      %v1471 = vmul.f32 1.0, %v1470
      %v1472 = vrcp.pop %v1319
      %v1473 = vmul.f32 1.0, %v1472
      %v1474 = vrcp.pop %v1320
      %v1475 = vmul.f32 1.0, %v1474
      %v1476 = vrcp.pop %v1321
      %v1477 = vmul.f32 1.0, %v1476
      %v1478 = vrcp.pop %v1322
      %v1479 = vmul.f32 1.0, %v1478
      %v1480 = vrcp.pop %v1323
      %v1481 = vmul.f32 1.0, %v1480
      %v1482 = vrcp.pop %v1324
      %v1483 = vmul.f32 1.0, %v1482
      %v1484 = vrcp.pop %v1325
      %v1485 = vmul.f32 1.0, %v1484
      %v1486 = vmul.f32 %v676, %v1327
      %v1487 = vmul.f32 %v678, %v1329
      %v1488 = vmul.f32 %v749, %v1331
      %v1489 = vmul.f32 %v751, %v1333
      %v1490 = vmul.f32 %v822, %v1335
      %v1491 = vmul.f32 %v824, %v1337
      %v1492 = vmul.f32 %v895, %v1339
      %v1493 = vmul.f32 %v897, %v1341
      %v1494 = vmul.f32 %v968, %v1343
      %v1495 = vmul.f32 %v970, %v1345
      %v1496 = vmul.f32 %v680, %v1347
      %v1497 = vmul.f32 %v682, %v1349
      %v1498 = vmul.f32 %v753, %v1351
      %v1499 = vmul.f32 %v755, %v1353
      %v1500 = vmul.f32 %v826, %v1355
      %v1501 = vmul.f32 %v828, %v1357
      %v1502 = vmul.f32 %v899, %v1359
      %v1503 = vmul.f32 %v901, %v1361
      %v1504 = vmul.f32 %v972, %v1363
      %v1505 = vmul.f32 %v974, %v1365
      %v1506 = vmul.f32 %v686, %v1367
      %v1507 = vmul.f32 %v688, %v1369
      %v1508 = vmul.f32 %v759, %v1371
      %v1509 = vmul.f32 %v761, %v1373
      %v1510 = vmul.f32 %v832, %v1375
      %v1511 = vmul.f32 %v834, %v1377
      %v1512 = vmul.f32 %v905, %v1379
      %v1513 = vmul.f32 %v907, %v1381
      %v1514 = vmul.f32 %v978, %v1383
      %v1515 = vmul.f32 %v980, %v1385
      %v1516 = vmul.f32 %v690, %v1387
      %v1517 = vmul.f32 %v692, %v1389
      %v1518 = vmul.f32 %v763, %v1391
      %v1519 = vmul.f32 %v765, %v1393
      %v1520 = vmul.f32 %v836, %v1395
      %v1521 = vmul.f32 %v838, %v1397
      %v1522 = vmul.f32 %v909, %v1399
      %v1523 = vmul.f32 %v911, %v1401
      %v1524 = vmul.f32 %v982, %v1403
      %v1525 = vmul.f32 %v984, %v1405
      %v1526 = vmul.f32 %v696, %v1407
      %v1527 = vmul.f32 %v698, %v1409
      %v1528 = vmul.f32 %v769, %v1411
      %v1529 = vmul.f32 %v771, %v1413
      %v1530 = vmul.f32 %v842, %v1415
      %v1531 = vmul.f32 %v844, %v1417
      %v1532 = vmul.f32 %v915, %v1419
      %v1533 = vmul.f32 %v917, %v1421
      %v1534 = vmul.f32 %v988, %v1423
      %v1535 = vmul.f32 %v990, %v1425
      %v1536 = vmul.f32 %v700, %v1427
      %v1537 = vmul.f32 %v702, %v1429
      %v1538 = vmul.f32 %v773, %v1431
      %v1539 = vmul.f32 %v775, %v1433
      %v1540 = vmul.f32 %v846, %v1435
      %v1541 = vmul.f32 %v848, %v1437
      %v1542 = vmul.f32 %v919, %v1439
      %v1543 = vmul.f32 %v921, %v1441
      %v1544 = vmul.f32 %v992, %v1443
      %v1545 = vmul.f32 %v994, %v1445
      %v1546 = vmul.f32 %v706, %v1447
      %v1547 = vmul.f32 %v708, %v1449
      %v1548 = vmul.f32 %v779, %v1451
      %v1549 = vmul.f32 %v781, %v1453
      %v1550 = vmul.f32 %v852, %v1455
      %v1551 = vmul.f32 %v854, %v1457
      %v1552 = vmul.f32 %v925, %v1459
      %v1553 = vmul.f32 %v927, %v1461
      %v1554 = vmul.f32 %v998, %v1463
      %v1555 = vmul.f32 %v1000, %v1465
      %v1556 = vmul.f32 %v710, %v1467
      %v1557 = vmul.f32 %v712, %v1469
      %v1558 = vmul.f32 %v783, %v1471
      %v1559 = vmul.f32 %v785, %v1473
      %v1560 = vmul.f32 %v856, %v1475
      %v1561 = vmul.f32 %v858, %v1477
      %v1562 = vmul.f32 %v929, %v1479
      %v1563 = vmul.f32 %v931, %v1481
      %v1564 = vmul.f32 %v1002, %v1483
      %v1565 = vmul.f32 %v1004, %v1485
      %v1566 = vld [vmem:[#allocation2] sm:$0xff]
      %v1567 = vld [vmem:[#allocation2 + $0x8] sm:$0xff]
      %v1568 = vld [vmem:[#allocation2 + $0x10] sm:$0xff]
      %v1569 = vld [vmem:[#allocation2 + $0x18] sm:$0xff]
      %v1570 = vld [vmem:[#allocation2 + $0x20] sm:$0xff]
      %v1571 = vld [vmem:[#allocation2 + $0x28] sm:$0xff]
      %v1572 = vld [vmem:[#allocation2 + $0x30] sm:$0xff]
      %v1573 = vld [vmem:[#allocation2 + $0x38] sm:$0xff]
      %v1574 = vld [vmem:[#allocation2 + $0x40] sm:$0xff]
      %v1575 = vld [vmem:[#allocation2 + $0x48] sm:$0xff]
      %v1576 = vadd.f32 %v1486, %v1496
      %v1577 = vadd.f32 %v1576, %v1506
      %v1578 = vadd.f32 %v1577, %v1516
      %v1579 = vadd.f32 %v1578, %v1526
      %v1580 = vadd.f32 %v1579, %v1536
      %v1581 = vadd.f32 %v1580, %v1546
      %v1582 = vadd.f32 %v1581, %v1556
      %v1583 = vadd.f32 %v1487, %v1497
      %v1584 = vadd.f32 %v1583, %v1507
      %v1585 = vadd.f32 %v1584, %v1517
      %v1586 = vadd.f32 %v1585, %v1527
      %v1587 = vadd.f32 %v1586, %v1537
      %v1588 = vadd.f32 %v1587, %v1547
      %v1589 = vadd.f32 %v1588, %v1557
      %v1590 = vadd.f32 %v1488, %v1498
      %v1591 = vadd.f32 %v1590, %v1508
      %v1592 = vadd.f32 %v1591, %v1518
      %v1593 = vadd.f32 %v1592, %v1528
      %v1594 = vadd.f32 %v1593, %v1538
      %v1595 = vadd.f32 %v1594, %v1548
      %v1596 = vadd.f32 %v1595, %v1558
      %v1597 = vadd.f32 %v1489, %v1499
      %v1598 = vadd.f32 %v1597, %v1509
      %v1599 = vadd.f32 %v1598, %v1519
      %v1600 = vadd.f32 %v1599, %v1529
      %v1601 = vadd.f32 %v1600, %v1539
      %v1602 = vadd.f32 %v1601, %v1549
      %v1603 = vadd.f32 %v1602, %v1559
      %v1604 = vadd.f32 %v1490, %v1500
      %v1605 = vadd.f32 %v1604, %v1510
      %v1606 = vadd.f32 %v1605, %v1520
      %v1607 = vadd.f32 %v1606, %v1530
      %v1608 = vadd.f32 %v1607, %v1540
      %v1609 = vadd.f32 %v1608, %v1550
      %v1610 = vadd.f32 %v1609, %v1560
      %v1611 = vadd.f32 %v1491, %v1501
      %v1612 = vadd.f32 %v1611, %v1511
      %v1613 = vadd.f32 %v1612, %v1521
      %v1614 = vadd.f32 %v1613, %v1531
      %v1615 = vadd.f32 %v1614, %v1541
      %v1616 = vadd.f32 %v1615, %v1551
      %v1617 = vadd.f32 %v1616, %v1561
      %v1618 = vadd.f32 %v1492, %v1502
      %v1619 = vadd.f32 %v1618, %v1512
      %v1620 = vadd.f32 %v1619, %v1522
      %v1621 = vadd.f32 %v1620, %v1532
      %v1622 = vadd.f32 %v1621, %v1542
      %v1623 = vadd.f32 %v1622, %v1552
      %v1624 = vadd.f32 %v1623, %v1562
      %v1625 = vadd.f32 %v1493, %v1503
      %v1626 = vadd.f32 %v1625, %v1513
      %v1627 = vadd.f32 %v1626, %v1523
      %v1628 = vadd.f32 %v1627, %v1533
      %v1629 = vadd.f32 %v1628, %v1543
      %v1630 = vadd.f32 %v1629, %v1553
      %v1631 = vadd.f32 %v1630, %v1563
      %v1632 = vadd.f32 %v1494, %v1504
      %v1633 = vadd.f32 %v1632, %v1514
      %v1634 = vadd.f32 %v1633, %v1524
      %v1635 = vadd.f32 %v1634, %v1534
      %v1636 = vadd.f32 %v1635, %v1544
      %v1637 = vadd.f32 %v1636, %v1554
      %v1638 = vadd.f32 %v1637, %v1564
      %v1639 = vadd.f32 %v1495, %v1505
      %v1640 = vadd.f32 %v1639, %v1515
      %v1641 = vadd.f32 %v1640, %v1525
      %v1642 = vadd.f32 %v1641, %v1535
      %v1643 = vadd.f32 %v1642, %v1545
      %v1644 = vadd.f32 %v1643, %v1555
      %v1645 = vadd.f32 %v1644, %v1565
      %v1646 = vadd.f32 %v1566, %v1582
      %v1647 = vadd.f32 %v1567, %v1589
      %v1648 = vadd.f32 %v1568, %v1596
      %v1649 = vadd.f32 %v1569, %v1603
      %v1650 = vadd.f32 %v1570, %v1610
      %v1651 = vadd.f32 %v1571, %v1617
      %v1652 = vadd.f32 %v1572, %v1624
      %v1653 = vadd.f32 %v1573, %v1631
      %v1654 = vadd.f32 %v1574, %v1638
      %v1655 = vadd.f32 %v1575, %v1645
      %1656 = vst [vmem:[#allocation2] sm:$0xff] %v1646
      %1657 = vst [vmem:[#allocation2 + $0x8] sm:$0xff] %v1647
      %1658 = vst [vmem:[#allocation2 + $0x10] sm:$0xff] %v1648
      %1659 = vst [vmem:[#allocation2 + $0x18] sm:$0xff] %v1649
      %1660 = vst [vmem:[#allocation2 + $0x20] sm:$0xff] %v1650
      %1661 = vst [vmem:[#allocation2 + $0x28] sm:$0xff] %v1651
      %1662 = vst [vmem:[#allocation2 + $0x30] sm:$0xff] %v1652
      %1663 = vst [vmem:[#allocation2 + $0x38] sm:$0xff] %v1653
      %1664 = vst [vmem:[#allocation2 + $0x40] sm:$0xff] %v1654
      %1665 = vst [vmem:[#allocation2 + $0x48] sm:$0xff] %v1655
      // Predicated region
      $region45: #{_forward_impl.1} parent=39 // pred_check
        %p1666 = pneg %p252
      $region46: #{_forward_impl.1} parent=39 // pred_check_branch
        %1668 = sbr.rel (%p1666) target = $region48
      $region47: #{_forward_impl.1} parent=39 // pred_region
        %v1669 = vld [vmem:[#allocation2] sm:$0xff]
        %v1670 = vld [vmem:[#allocation2 + $0x8] sm:$0xff]
        %v1671 = vld [vmem:[#allocation2 + $0x10] sm:$0xff]
        %v1672 = vld [vmem:[#allocation2 + $0x18] sm:$0xff]
        %v1673 = vld [vmem:[#allocation2 + $0x20] sm:$0xff]
        %v1674 = vld [vmem:[#allocation2 + $0x28] sm:$0xff]
        %v1675 = vld [vmem:[#allocation2 + $0x30] sm:$0xff]
        %v1676 = vld [vmem:[#allocation2 + $0x38] sm:$0xff]
        %v1677 = vld [vmem:[#allocation2 + $0x40] sm:$0xff]
        %v1678 = vld [vmem:[#allocation2 + $0x48] sm:$0xff]
        %v1679 = vrot.slane %v1669, 4
        %v1680 = vadd.f32 %v1669, %v1679
        %v1681 = vrot.slane %v1680, 2
        %v1682 = vadd.f32 %v1680, %v1681
        %v1683 = vrot.slane %v1682, 1
        %v1684 = vadd.f32 %v1682, %v1683
        %v1685 = vrot.slane %v1670, 4
        %v1686 = vadd.f32 %v1670, %v1685
        %v1687 = vrot.slane %v1686, 2
        %v1688 = vadd.f32 %v1686, %v1687
        %v1689 = vrot.slane %v1688, 1
        %v1690 = vadd.f32 %v1688, %v1689
        %v1691 = vrot.slane %v1671, 4
        %v1692 = vadd.f32 %v1671, %v1691
        %v1693 = vrot.slane %v1692, 2
        %v1694 = vadd.f32 %v1692, %v1693
        %v1695 = vrot.slane %v1694, 1
        %v1696 = vadd.f32 %v1694, %v1695
        %v1697 = vrot.slane %v1672, 4
        %v1698 = vadd.f32 %v1672, %v1697
        %v1699 = vrot.slane %v1698, 2
        %v1700 = vadd.f32 %v1698, %v1699
        %v1701 = vrot.slane %v1700, 1
        %v1702 = vadd.f32 %v1700, %v1701
        %v1703 = vrot.slane %v1673, 4
        %v1704 = vadd.f32 %v1673, %v1703
        %v1705 = vrot.slane %v1704, 2
        %v1706 = vadd.f32 %v1704, %v1705
        %v1707 = vrot.slane %v1706, 1
        %v1708 = vadd.f32 %v1706, %v1707
        %v1709 = vrot.slane %v1674, 4
        %v1710 = vadd.f32 %v1674, %v1709
        %v1711 = vrot.slane %v1710, 2
        %v1712 = vadd.f32 %v1710, %v1711
        %v1713 = vrot.slane %v1712, 1
        %v1714 = vadd.f32 %v1712, %v1713
        %v1715 = vrot.slane %v1675, 4
        %v1716 = vadd.f32 %v1675, %v1715
        %v1717 = vrot.slane %v1716, 2
        %v1718 = vadd.f32 %v1716, %v1717
        %v1719 = vrot.slane %v1718, 1
        %v1720 = vadd.f32 %v1718, %v1719
        %v1721 = vrot.slane %v1676, 4
        %v1722 = vadd.f32 %v1676, %v1721
        %v1723 = vrot.slane %v1722, 2
        %v1724 = vadd.f32 %v1722, %v1723
        %v1725 = vrot.slane %v1724, 1
        %v1726 = vadd.f32 %v1724, %v1725
        %v1727 = vrot.slane %v1677, 4
        %v1728 = vadd.f32 %v1677, %v1727
        %v1729 = vrot.slane %v1728, 2
        %v1730 = vadd.f32 %v1728, %v1729
        %v1731 = vrot.slane %v1730, 1
        %v1732 = vadd.f32 %v1730, %v1731
        %v1733 = vrot.slane %v1678, 4
        %v1734 = vadd.f32 %v1678, %v1733
        %v1735 = vrot.slane %v1734, 2
        %v1736 = vadd.f32 %v1734, %v1735
        %v1737 = vrot.slane %v1736, 1
        %v1738 = vadd.f32 %v1736, %v1737
        %v1749 = vcombine.low %v1684, %v1690
        %v1750 = vcombine.low %v1696, %v1702
        %v1751 = vcombine.low %v1708, %v1714
        %v1752 = vcombine.low %v1720, %v1726
        %v1754 = vunpack.c.l.s4 1966171168
        %v1755 = vunpack.c.0.s8 %v1754
        %v1756 = vlaneseq
        %v1757 = vshrl.u32 %v1756, 7
        %v1758 = vsub.s32 %v1755, %v1757
        %v1759 = vrot.slane %v1749, %v1758
        %v1761 = vunpack.c.l.s4 1966171168
        %v1762 = vunpack.c.0.s8 %v1761
        %v1763 = vlaneseq
        %v1764 = vshrl.u32 %v1763, 7
        %v1765 = vsub.s32 %v1762, %v1764
        %v1766 = vrot.slane %v1750, %v1765
        %v1768 = vunpack.c.l.s4 1966171168
        %v1769 = vunpack.c.0.s8 %v1768
        %v1770 = vlaneseq
        %v1771 = vshrl.u32 %v1770, 7
        %v1772 = vsub.s32 %v1769, %v1771
        %v1773 = vrot.slane %v1751, %v1772
        %v1775 = vunpack.c.l.s4 1966171168
        %v1776 = vunpack.c.0.s8 %v1775
        %v1777 = vlaneseq
        %v1778 = vshrl.u32 %v1777, 7
        %v1779 = vsub.s32 %v1776, %v1778
        %v1780 = vrot.slane %v1752, %v1779
        %v1781 = vcombine.low %v1759, %v1766
        %v1782 = vcombine.low %v1773, %v1780
        %v1784 = vunpack.c.l.s4 1966171168
        %v1785 = vunpack.c.0.s8 %v1784
        %v1786 = vlaneseq
        %v1787 = vshrl.u32 %v1786, 7
        %v1788 = vsub.s32 %v1785, %v1787
        %v1789 = vrot.slane %v1781, %v1788
        %v1791 = vunpack.c.l.s4 1966171168
        %v1792 = vunpack.c.0.s8 %v1791
        %v1793 = vlaneseq
        %v1794 = vshrl.u32 %v1793, 7
        %v1795 = vsub.s32 %v1792, %v1794
        %v1796 = vrot.slane %v1782, %v1795
        %v1797 = vcombine.low %v1789, %v1796
        %v1798 = vcombine.low %v1732, %v1738
        %v1800 = vunpack.c.l.s4 1966171168
        %v1801 = vunpack.c.0.s8 %v1800
        %v1802 = vlaneseq
        %v1803 = vshrl.u32 %v1802, 7
        %v1804 = vsub.s32 %v1801, %v1803
        %v1805 = vrot.slane %v1798, %v1804
        %v1807 = vunpack.c.l.s4 1966171168
        %v1808 = vunpack.c.0.s8 %v1807
        %v1809 = vlaneseq
        %v1810 = vshrl.u32 %v1809, 7
        %v1811 = vsub.s32 %v1808, %v1810
        %v1812 = vrot.slane %v1805, %v1811
        %1815 = vst [vmem:[%s250] sm:$0xff] %v1797
        %v1816 = vlaneseq
        %vm1817 = vcmp.ge.s32.totalorder %v1816, 0
        %vm1818 = vcmp.lt.s32.totalorder %v1816, 256
        %vm1819 = vmand %vm1817, %vm1818
        %1820 = vst.msk [vmem:[%s250 + $0x8] sm:$0x3] %vm1819, %v1812
      $region48: #{_forward_impl.1} parent=39 // pred_fallthru
        _
      %p1821 = scmp.lt.s32.totalorder %s20, 1
      %s1822 = scalar_select %p1821, %s20, 1
      %s1823 = smul.addr %s1822, 10
      %s1824 = scalar_lea.vmem %s5, %s1823
      // Predicated region
      $region49: #{_forward_impl.1} parent=39 // pred_check
        %p1825 = pneg %p158
      $region50: #{_forward_impl.1} parent=39 // pred_check_branch
        %1827 = sbr.rel (%p1825) target = $region52
      $region51: #{_forward_impl.1} parent=39 // pred_region
        _
      $region52: #{_forward_impl.1} parent=39 // pred_fallthru
        _
    $region40: #{_forward_impl.1} parent=5 // pred_fallthru
      _
    %p1828 = scmp.le.s32.totalorder 2, %s11
    // Predicated region
    $region53: #{_forward_impl.1} parent=5 // pred_check
      %p1829 = pneg %p1828
    $region54: #{_forward_impl.1} parent=5 // pred_check_branch
      %1831 = sbr.rel (%p1829) target = $region56
    $region55: #{_forward_impl.1} parent=5 // pred_region
      %s1832 = ssub.s32 %s11, 2
      // Predicated region
      $region57: #{_forward_impl.1} parent=55 // pred_check
        %p1833 = pneg %p164
      $region58: #{_forward_impl.1} parent=55 // pred_check_branch
        %1835 = sbr.rel (%p1833) target = $region60
      $region59: #{_forward_impl.1} parent=55 // pred_region
        %p1836 = scmp.lt.s32.totalorder %s22, 1
        %s1837 = scalar_select %p1836, %s22, 1
        %s1838 = smul.addr %s1837, 10
        %s1839 = scalar_lea.vmem %s5, %s1838
      $region60: #{_forward_impl.1} parent=55 // pred_fallthru
        _
    $region56: #{_forward_impl.1} parent=5 // pred_fallthru
      _
  $region6: #{_forward_impl.1} parent=0 // loop_footer
    %s15 = sadd.s32 1, %s11
  $region7: #{_forward_impl.1} parent=0 // loop_footer_branch
    %10 = sbr.rel target = $region3
  $region8: #{_forward_impl.1} parent=0 // loop_exit
    _

</llo_original>
